<compile_context>
chip_gen: v5e
topology: v5e:2x2
jax: 0.10.0
libtpu: 0.0.40
codegen_flags: <defaults>
</compile_context>

<pallas_src>
import functools

import jax
import jax.numpy as jnp
from jax.experimental import pallas as pl
from jax.experimental.pallas import tpu as pltpu

NUM_CLASSES = 91
_RESNET101_CFG = ((64, 3, 1), (128, 4, 2), (256, 23, 2), (512, 3, 2))


def _pick_tile(n, candidates):
    for c in candidates:
        if n % c == 0:
            return c
    return n


def _pick_tk(k):
    """K-reduction tile: full K when small, else a lane-aligned (x128) tile."""
    if k <= 1024:
        return k
    for c in (512, 768, 384, 256, 128):
        if k % c == 0:
            return c
    return k


# ----------------------------- Pallas kernels ------------------------------ #

def _mm_bn_kernel(x_ref, w_ref, s_ref, b_ref, o_ref, acc_ref, *, relu):
    """K-tiled matmul; f32 accumulator; fused (folded) BN + optional ReLU."""
    @pl.when(pl.program_id(2) == 0)
    def _():
        acc_ref[...] = jnp.zeros_like(acc_ref)

    acc_ref[...] += jnp.dot(x_ref[...], w_ref[...],
                            preferred_element_type=jnp.float32)

    @pl.when(pl.program_id(2) == pl.num_programs(2) - 1)
    def _():
        r = acc_ref[...] * s_ref[...] + b_ref[...]
        if relu:
            r = jnp.maximum(r, 0.0)
        o_ref[...] = r.astype(o_ref.dtype)


def _mm_bn_res_kernel(x_ref, w_ref, s_ref, b_ref, res_ref, o_ref, acc_ref):
    """Same as above, plus fused residual add + ReLU (bottleneck conv3)."""
    @pl.when(pl.program_id(2) == 0)
    def _():
        acc_ref[...] = jnp.zeros_like(acc_ref)

    acc_ref[...] += jnp.dot(x_ref[...], w_ref[...],
                            preferred_element_type=jnp.float32)

    @pl.when(pl.program_id(2) == pl.num_programs(2) - 1)
    def _():
        r = (acc_ref[...] * s_ref[...] + b_ref[...]
             + res_ref[...].astype(jnp.float32))
        o_ref[...] = jnp.maximum(r, 0.0).astype(o_ref.dtype)


@functools.partial(jax.jit, static_argnames=("relu",))
def matmul_affine(x, w, scale, bias, residual=None, relu=True):
    """out = act((x @ w) * scale + bias [+ residual]).

    x:(M,K) bf16, w:(K,N) bf16, scale/bias:(1,N) f32, residual:(M,N) bf16|None.
    bf16 operands feed the MXU; accumulation and the affine/residual/ReLU
    epilogue run in f32; output is stored bf16.
    """
    M, K = x.shape
    _, N = w.shape
    tn = _pick_tile(N, (256, 128))
    tm_cands = ((512, 256, 128, 64, 32, 16, 8) if tn <= 128
                else (256, 128, 64, 32, 16, 8))
    tm = _pick_tile(M, tm_cands)
    tk = _pick_tk(K)
    grid = (M // tm, N // tn, K // tk)

    in_specs = [
        pl.BlockSpec((tm, tk), lambda i, j, k: (i, k)),
        pl.BlockSpec((tk, tn), lambda i, j, k: (k, j)),
        pl.BlockSpec((1, tn), lambda i, j, k: (0, j)),
        pl.BlockSpec((1, tn), lambda i, j, k: (0, j)),
    ]
    args = [x, w, scale, bias]
    if residual is not None:
        in_specs.append(pl.BlockSpec((tm, tn), lambda i, j, k: (i, j)))
        args.append(residual)
        kernel = _mm_bn_res_kernel
    else:
        kernel = functools.partial(_mm_bn_kernel, relu=relu)

    return pl.pallas_call(
        kernel,
        out_shape=jax.ShapeDtypeStruct((M, N), jnp.bfloat16),
        grid_spec=pltpu.PrefetchScalarGridSpec(
            num_scalar_prefetch=0,
            grid=grid,
            in_specs=in_specs,
            out_specs=pl.BlockSpec((tm, tn), lambda i, j, k: (i, j)),
            scratch_shapes=[pltpu.VMEM((tm, tn), jnp.float32)],
        ),
        compiler_params=pltpu.CompilerParams(
            dimension_semantics=("parallel", "parallel", "arbitrary")),
    )(*args)


def _max_taps_kernel(x_ref, o_ref):
    o_ref[...] = jnp.max(x_ref[...], axis=0)


@jax.jit
def max_over_taps(x):
    """x: (T, M, C) -> elementwise max over T -> (M, C)."""
    T, M, C = x.shape
    tm = _pick_tile(M, (512, 256, 128, 64, 32, 16, 8))
    return pl.pallas_call(
        _max_taps_kernel,
        out_shape=jax.ShapeDtypeStruct((M, C), x.dtype),
        grid_spec=pltpu.PrefetchScalarGridSpec(
            num_scalar_prefetch=0,
            grid=(M // tm,),
            in_specs=[pl.BlockSpec((T, tm, C), lambda i: (0, i, 0))],
            out_specs=pl.BlockSpec((tm, C), lambda i: (i, 0)),
        ),
        compiler_params=pltpu.CompilerParams(dimension_semantics=("parallel",)),
    )(x)


def _head_kernel(x_ref, w_ref, b_ref, o_ref):
    xm = jnp.mean(x_ref[...].astype(jnp.float32), axis=1)   # global avg pool
    o_ref[...] = (jnp.dot(xm, w_ref[...], preferred_element_type=jnp.float32)
                  + b_ref[...])


@jax.jit
def avgpool_fc(x, w, b):
    """x:(B,HW,C) bf16, w:(C,Npad) f32, b:(1,Npad) f32 -> (B,Npad) f32 logits."""
    B, HW, C = x.shape
    _, N = w.shape
    return pl.pallas_call(
        _head_kernel,
        out_shape=jax.ShapeDtypeStruct((B, N), jnp.float32),
        grid_spec=pltpu.PrefetchScalarGridSpec(
            num_scalar_prefetch=0,
            grid=(1,),
            in_specs=[pl.BlockSpec((B, HW, C), lambda i: (0, 0, 0)),
                      pl.BlockSpec((C, N), lambda i: (0, 0)),
                      pl.BlockSpec((1, N), lambda i: (0, 0))],
            out_specs=pl.BlockSpec((B, N), lambda i: (0, 0)),
        ),
    )(x, w, b)


# ------------------------------ JAX glue ----------------------------------- #

def conv2d_bn(x, w_hwio, scale, bias, *, stride=1, padding=0, relu=True,
              residual=None):
    """Conv (no conv bias, torchvision-style) + folded BN + optional
    (residual add +) ReLU, all fused into the matmul epilogue."""
    B, H, W, Cin = x.shape
    kh, kw, _, Cout = w_hwio.shape
    if padding:
        x = jnp.pad(x, ((0, 0), (padding, padding), (padding, padding), (0, 0)))
    Hp, Wp = x.shape[1], x.shape[2]
    Ho = (Hp - kh) // stride + 1
    Wo = (Wp - kw) // stride + 1
    if kh == 1 and kw == 1:
        cols = x[:, ::stride, ::stride, :].reshape(B * Ho * Wo, Cin)
    else:
        # TODO(synk): fold the kh*kw taps into the matmul K grid axis (index_map
        #             offsets on the padded NHWC activation) instead of
        #             materializing the bf16 im2col tensor in HBM.
        taps = [x[:, dy:dy + stride * Ho:stride, dx:dx + stride * Wo:stride, :]
                for dy in range(kh) for dx in range(kw)]
        cols = jnp.concatenate(taps, axis=-1).reshape(B * Ho * Wo, kh * kw * Cin)
    wmat = w_hwio.reshape(kh * kw * Cin, Cout)
    res2d = None if residual is None else residual.reshape(B * Ho * Wo, Cout)
    out = matmul_affine(cols, wmat, scale, bias, res2d, relu=relu)
    return out.reshape(B, Ho, Wo, Cout)


def maxpool_3x3_s2_p1(x):
    B, H, W, C = x.shape
    xp = jnp.pad(x, ((0, 0), (1, 1), (1, 1), (0, 0)), constant_values=-jnp.inf)
    Ho = (H + 2 - 3) // 2 + 1
    Wo = (W + 2 - 3) // 2 + 1
    taps = [xp[:, dy:dy + 2 * Ho:2, dx:dx + 2 * Wo:2, :]
            for dy in range(3) for dx in range(3)]
    stacked = jnp.stack(taps, axis=0).reshape(9, B * Ho * Wo, C)
    return max_over_taps(stacked).reshape(B, Ho, Wo, C)


# --------------------------- parameter creation ----------------------------- #

class _KeyGen:
    def __init__(self, seed):
        self._key = jax.random.PRNGKey(seed)
        self._n = 0

    def __call__(self):
        self._n += 1
        return jax.random.fold_in(self._key, self._n)


def _init_conv_bn(kg, kh, kw, cin, cout, w_gain=1.0):
    fan_in = kh * kw * cin
    w = (jax.random.normal(kg(), (kh, kw, cin, cout), jnp.float32)
         * jnp.sqrt(2.0 / fan_in) * w_gain).astype(jnp.bfloat16)
    s = 1.0 + 0.01 * jax.random.normal(kg(), (1, cout), jnp.float32)
    b = 0.01 * jax.random.normal(kg(), (1, cout), jnp.float32)
    return {"w": w, "s": s, "b": b}


def make_resnet101_params(seed=0, num_classes=NUM_CLASSES):
    kg = _KeyGen(seed)
    params = {"conv1": _init_conv_bn(kg, 7, 7, 3, 64)}
    layers = []
    inplanes = 64
    for planes, blocks, stride in _RESNET101_CFG:
        stage = []
        for b in range(blocks):
            s = stride if b == 0 else 1
            blk = {
                "conv1": _init_conv_bn(kg, 1, 1, inplanes, planes),
                "conv2": _init_conv_bn(kg, 3, 3, planes, planes),
                # damp the expansion conv so 33 residual adds stay tame
                "conv3": _init_conv_bn(kg, 1, 1, planes, planes * 4, w_gain=0.5),
            }
            if b == 0 and (s != 1 or inplanes != planes * 4):
                blk["downsample"] = _init_conv_bn(kg, 1, 1, inplanes, planes * 4)
            stage.append(blk)
            inplanes = planes * 4
        layers.append(stage)
    params["layers"] = layers
    # fc head padded to a lane-dense 128 output columns (sliced to 91 afterwards)
    n_pad = ((num_classes + 127) // 128) * 128
    fc_w = (jax.random.normal(kg(), (2048, num_classes), jnp.float32)
            * jnp.sqrt(1.0 / 2048))
    fc_b = 0.01 * jax.random.normal(kg(), (1, num_classes), jnp.float32)
    params["fc_w"] = jnp.pad(fc_w, ((0, 0), (0, n_pad - num_classes)))
    params["fc_b"] = jnp.pad(fc_b, ((0, 0), (0, n_pad - num_classes)))
    return params


# ------------------------------ forward pass -------------------------------- #

def _bottleneck(x, blk, stride):
    out = conv2d_bn(x, blk["conv1"]["w"], blk["conv1"]["s"], blk["conv1"]["b"],
                    stride=1, padding=0, relu=True)
    out = conv2d_bn(out, blk["conv2"]["w"], blk["conv2"]["s"], blk["conv2"]["b"],
                    stride=stride, padding=1, relu=True)
    if "downsample" in blk:
        ds = blk["downsample"]
        identity = conv2d_bn(x, ds["w"], ds["s"], ds["b"],
                             stride=stride, padding=0, relu=False)
    else:
        identity = x
    # conv3: BN affine + residual add + ReLU all fused into the matmul epilogue
    return conv2d_bn(out, blk["conv3"]["w"], blk["conv3"]["s"], blk["conv3"]["b"],
                     stride=1, padding=0, relu=True, residual=identity)


@jax.jit
def encoder_forward(images_nchw, params):
    """images_nchw: (B, 3, H, W) float32 (PyTorch convention) -> logits (B, 91)."""
    x = jnp.transpose(images_nchw, (0, 2, 3, 1)).astype(jnp.bfloat16)  # NHWC bf16
    c1 = params["conv1"]
    x = conv2d_bn(x, c1["w"], c1["s"], c1["b"], stride=2, padding=3, relu=True)
    x = maxpool_3x3_s2_p1(x)
    for stage_params, (_planes, _blocks, stage_stride) in zip(params["layers"],
                                                              _RESNET101_CFG):
        for b, blk in enumerate(stage_params):
            x = _bottleneck(x, blk, stage_stride if b == 0 else 1)
    B, H, W, C = x.shape
    logits = avgpool_fc(x.reshape(B, H * W, C), params["fc_w"], params["fc_b"])
    return logits[:, :NUM_CLASSES]


# ---------------------------------- main ------------------------------------ #

if __name__ == "__main__":
    key = jax.random.PRNGKey(0)
    images = jax.random.normal(key, (2, 3, 64, 64), jnp.float32)  # NCHW input
    params = make_resnet101_params(seed=0, num_classes=NUM_CLASSES)

    out = encoder_forward(images, params)
    out = jax.block_until_ready(out)

    assert out.shape == (2, NUM_CLASSES), out.shape
    assert bool(jnp.all(jnp.isfinite(out)))
    print("KERNEL_OK")
</pallas_src>

<mosaic_0001>
module attributes {stable_mosaic.version = 11 : i64} {
  func.func @_mm_bn_kernel(%arg0: i32, %arg1: i32, %arg2: i32, %arg3: memref<512x147xbf16, #tpu.memory_space<vmem>>, %arg4: memref<147x64xbf16, #tpu.memory_space<vmem>>, %arg5: memref<1x64xf32, #tpu.memory_space<vmem>>, %arg6: memref<1x64xf32, #tpu.memory_space<vmem>>, %arg7: memref<512x64xbf16, #tpu.memory_space<vmem>>, %arg8: memref<512x64xf32, #tpu.memory_space<vmem>>) attributes {dimension_semantics = [#tpu.dimension_semantics<parallel>, #tpu.dimension_semantics<parallel>, #tpu.dimension_semantics<arbitrary>], iteration_bounds = array<i64: 4, 1, 1>, scalar_prefetch = 0 : i64, scratch_operands = 1 : i64, tpu.core_type = #tpu.core_type<tc>, window_params = [{transform_indices = @transform_0, window_bounds = array<i64: 512, 147>}, {transform_indices = @transform_1, window_bounds = array<i64: 147, 64>}, {transform_indices = @transform_2, window_bounds = array<i64: 1, 64>}, {transform_indices = @transform_3, window_bounds = array<i64: 1, 64>}, {transform_indices = @transform_4, window_bounds = array<i64: 512, 64>}]} {
    %c0_i32 = arith.constant 0 : i32
    %0 = arith.cmpi eq, %arg2, %c0_i32 : i32
    %1 = arith.extui %0 : i1 to i32
    %c0_i32_0 = arith.constant 0 : i32
    %2 = arith.cmpi ne, %1, %c0_i32_0 : i32
    scf.if %2 {
      %cst_10 = arith.constant 0.000000e+00 : f32
      %12 = vector.broadcast %cst_10 : f32 to vector<512x64xf32>
      %c0_11 = arith.constant 0 : index
      %c0_12 = arith.constant 0 : index
      %13 = vector.load %arg8[%c0_11, %c0_12] : memref<512x64xf32, #tpu.memory_space<vmem>>, vector<512x64xf32>
      tpu.vector_store %arg8[%c0_11, %c0_12], %12 {strides = array<i32>} : memref<512x64xf32, #tpu.memory_space<vmem>>, vector<512x64xf32>,
    } else {
    }
    %c0 = arith.constant 0 : index
    %c0_1 = arith.constant 0 : index
    %3 = vector.load %arg8[%c0, %c0_1] : memref<512x64xf32, #tpu.memory_space<vmem>>, vector<512x64xf32>
    %c0_2 = arith.constant 0 : index
    %c0_3 = arith.constant 0 : index
    %4 = vector.load %arg3[%c0_2, %c0_3] : memref<512x147xbf16, #tpu.memory_space<vmem>>, vector<512x147xbf16>
    %c0_4 = arith.constant 0 : index
    %c0_5 = arith.constant 0 : index
    %5 = vector.load %arg4[%c0_4, %c0_5] : memref<147x64xbf16, #tpu.memory_space<vmem>>, vector<147x64xbf16>
    %cst = arith.constant dense<0.000000e+00> : vector<512x64xf32>
    %6 = tpu.matmul %4, %5, %cst {dimension_numbers = #tpu.dot_dimension_numbers<[1], [0], [0], [1], [0, 0, 1, 1], [], []>} : vector<512x147xbf16>, vector<147x64xbf16>, vector<512x64xf32> -> vector<512x64xf32>
    %7 = arith.addf %3, %6 : vector<512x64xf32>
    %c0_6 = arith.constant 0 : index
    %c0_7 = arith.constant 0 : index
    %8 = vector.load %arg8[%c0_6, %c0_7] : memref<512x64xf32, #tpu.memory_space<vmem>>, vector<512x64xf32>
    tpu.vector_store %arg8[%c0_6, %c0_7], %7 {strides = array<i32>} : memref<512x64xf32, #tpu.memory_space<vmem>>, vector<512x64xf32>,
    %c0_i32_8 = arith.constant 0 : i32
    %9 = arith.cmpi eq, %arg2, %c0_i32_8 : i32
    %10 = arith.extui %9 : i1 to i32
    %c0_i32_9 = arith.constant 0 : i32
    %11 = arith.cmpi ne, %10, %c0_i32_9 : i32
    scf.if %11 {
      %c0_10 = arith.constant 0 : index
      %c0_11 = arith.constant 0 : index
      %12 = vector.load %arg8[%c0_10, %c0_11] : memref<512x64xf32, #tpu.memory_space<vmem>>, vector<512x64xf32>
      %c0_12 = arith.constant 0 : index
      %c0_13 = arith.constant 0 : index
      %13 = vector.load %arg5[%c0_12, %c0_13] : memref<1x64xf32, #tpu.memory_space<vmem>>, vector<1x64xf32>
      %14 = vector.broadcast %13 : vector<1x64xf32> to vector<512x64xf32>
      %15 = arith.mulf %12, %14 : vector<512x64xf32>
      %c0_14 = arith.constant 0 : index
      %c0_15 = arith.constant 0 : index
      %16 = vector.load %arg6[%c0_14, %c0_15] : memref<1x64xf32, #tpu.memory_space<vmem>>, vector<1x64xf32>
      %17 = vector.broadcast %16 : vector<1x64xf32> to vector<512x64xf32>
      %18 = arith.addf %15, %17 : vector<512x64xf32>
      %cst_16 = arith.constant 0.000000e+00 : f32
      %19 = vector.broadcast %cst_16 : f32 to vector<512x64xf32>
      %20 = arith.maximumf %18, %19 : vector<512x64xf32>
      %21 = arith.truncf %20 : vector<512x64xf32> to vector<512x64xbf16>
      %c0_17 = arith.constant 0 : index
      %c0_18 = arith.constant 0 : index
      %22 = vector.load %arg7[%c0_17, %c0_18] : memref<512x64xbf16, #tpu.memory_space<vmem>>, vector<512x64xbf16>
      tpu.vector_store %arg7[%c0_17, %c0_18], %21 {strides = array<i32>} : memref<512x64xbf16, #tpu.memory_space<vmem>>, vector<512x64xbf16>,
    } else {
    }
    return
  }
  func.func @transform_0(%arg0: i32, %arg1: i32, %arg2: i32) -> (i32, i32) {
    %c0_i32 = arith.constant 0 : i32
    return %arg0, %arg2 : i32, i32
  }
  func.func @transform_1(%arg0: i32, %arg1: i32, %arg2: i32) -> (i32, i32) {
    %c0_i32 = arith.constant 0 : i32
    return %arg2, %arg1 : i32, i32
  }
  func.func @transform_2(%arg0: i32, %arg1: i32, %arg2: i32) -> (i32, i32) {
    %c0_i32 = arith.constant 0 : i32
    %c0_i32_0 = arith.constant 0 : i32
    return %c0_i32, %arg1 : i32, i32
  }
  func.func @transform_3(%arg0: i32, %arg1: i32, %arg2: i32) -> (i32, i32) {
    %c0_i32 = arith.constant 0 : i32
    %c0_i32_0 = arith.constant 0 : i32
    return %c0_i32, %arg1 : i32, i32
  }
  func.func @transform_4(%arg0: i32, %arg1: i32, %arg2: i32) -> (i32, i32) {
    %c0_i32 = arith.constant 0 : i32
    return %arg0, %arg1 : i32, i32
  }
}

</mosaic_0001>

<llo_original>
// kernel: matmul_affine.1
$region0: #{matmul_affine.1}
  #allocation0 [shape = 'u32[]', space=smem, size = 0x4, offset = 0x4, fixed_abs, tag = 'smem constant byte address 0x4 - core index']
  #allocation1 [shape = 'u32[72,128]{1,0:T(1,128)}', space=vmem, size = 0x9000, scoped, tag = 'internal scratch']
  #allocation2 [shape = 'f32[512,64]{1,0:T(8,128)}', space=vmem, size = 0x40000, scoped, tag = 'scratch operand']
  %s0 = inlined_call_operand.vmem [shape: bf16[2048,147], index: 0, kind: input, shape index: {}]
  %s1 = inlined_call_operand.vmem [shape: bf16[147,64], index: 1, kind: input, shape index: {}]
  %s2 = inlined_call_operand.vmem [shape: f32[1,64], index: 2, kind: input, shape index: {}]
  %s3 = inlined_call_operand.vmem [shape: f32[1,64], index: 3, kind: input, shape index: {}]
  %s4 = inlined_call_operand.vmem [shape: bf16[2048,64], index: 4, kind: output, shape index: {}]
  %s5 = sld [smem:[#allocation0]]
  $region57: #{matmul_affine.1} parent=0
    _
  %s7 = ssub.s32 1, %s5
  %s8 = scalar_select 0, %s7, %s5
  loop: start=0, step=1, limit=6
  $region2: #{matmul_affine.1} parent=0 // loop_pre_header
    _
  $region3: #{matmul_affine.1} parent=0 // loop_header
    %s10 = sphi 0, %s14
    %p11 = scmp.ge.s32.totalorder %s10, 6
    %s17 = sphi 0, %s36
    %s18 = sphi 0, %s32
    %s19 = sphi 0, %s28
    %s20 = sphi 0, %s17
    %s21 = sphi 0, %s18
    %s22 = sphi 0, %s19
    %s23 = sphi 0, %s20
    %s24 = sphi 0, %s21
    %s25 = sphi 0, %s22
    %s41 = sphi 0, %s43
    %s44 = sphi 0, %s41
    %s45 = sphi 0, %s44
    %s61 = sphi 0, %s45
    %s69 = sphi 0, %s71
    %s72 = sphi 0, %s69
    %s73 = sphi 0, %s72
    %s89 = sphi 0, %s73
    %s95 = sphi 0, %s97
    %s98 = sphi 0, %s95
    %s99 = sphi 0, %s98
    %s115 = sphi 0, %s99
    %s121 = sphi 0, %s123
    %s124 = sphi 0, %s121
    %s125 = sphi 0, %s124
    %s141 = sphi 0, %s125
    %s149 = sphi 0, %s151
    %s152 = sphi 0, %s149
    %s153 = sphi 0, %s152
    %s169 = sphi 0, %s153
  $region4: #{matmul_affine.1} parent=0 // loop_header_branch
    %13 = sbr.rel (%p11) target = $region8
  $region5: #{matmul_affine.1} parent=0 // loop_body
    %s15 = ssub.s32 %s10, 1
    %s16 = ssub.s32 %s10, 2
    %s26 = sadd.s32 1, %s19
    %p27 = scmp.ge.s32.totalorder %s26, 1
    %s28 = scalar_select %p27, 0, %s26
    %s29 = sadd.s32 1, %s18
    %s30 = scalar_select %p27, %s29, %s18
    %p31 = scmp.ge.s32.totalorder %s30, 1
    %s32 = scalar_select %p31, 0, %s30
    %s33 = sadd.s32 1, %s17
    %s34 = scalar_select %p31, %s33, %s17
    %p35 = scmp.ge.s32.totalorder %s34, 4
    %s36 = scalar_select %p35, 0, %s34
    %s37 = ssub.s32 %s17, %s36
    %s38 = ssub.s32 %s19, %s28
    %s39 = sor.u32 %s37, %s38
    %p40 = scmp.eq.s32.totalorder %s39, 0
    %s42 = sadd.s32 %s41, 1
    %s43 = scalar_select %p40, %s41, %s42
    %p46 = pneg %p40
    %p47 = scmp.eq.s32.totalorder %s10, 3
    %p48 = por %p46, %p47
    %p49 = scmp.ne.s32.totalorder %s41, %s44
    %p50 = scmp.eq.s32.totalorder %s10, 0
    %p51 = por %p49, %p50
    %p52 = scmp.ne.s32.totalorder %s41, %s44
    %p53 = scmp.eq.s32.totalorder %s15, 3
    %p54 = por %p52, %p53
    %p55 = scmp.ne.s32.totalorder %s44, %s45
    %p56 = scmp.eq.s32.totalorder %s15, 0
    %p57 = por %p55, %p56
    %p58 = scmp.ne.s32.totalorder %s44, %s45
    %p59 = scmp.eq.s32.totalorder %s16, 3
    %p60 = por %p58, %p59
    %p62 = scmp.ne.s32.totalorder %s45, %s61
    %p63 = scmp.eq.s32.totalorder %s16, 0
    %p64 = por %p62, %p63
    %s65 = ssub.s32 %s19, %s28
    %s66 = ssub.s32 %s18, %s32
    %s67 = sor.u32 %s65, %s66
    %p68 = scmp.eq.s32.totalorder %s67, 0
    %s70 = sadd.s32 %s69, 1
    %s71 = scalar_select %p68, %s69, %s70
    %p74 = pneg %p68
    %p75 = scmp.eq.s32.totalorder %s10, 3
    %p76 = por %p74, %p75
    %p77 = scmp.ne.s32.totalorder %s69, %s72
    %p78 = scmp.eq.s32.totalorder %s10, 0
    %p79 = por %p77, %p78
    %p80 = scmp.ne.s32.totalorder %s69, %s72
    %p81 = scmp.eq.s32.totalorder %s15, 3
    %p82 = por %p80, %p81
    %p83 = scmp.ne.s32.totalorder %s72, %s73
    %p84 = scmp.eq.s32.totalorder %s15, 0
    %p85 = por %p83, %p84
    %p86 = scmp.ne.s32.totalorder %s72, %s73
    %p87 = scmp.eq.s32.totalorder %s16, 3
    %p88 = por %p86, %p87
    %p90 = scmp.ne.s32.totalorder %s73, %s89
    %p91 = scmp.eq.s32.totalorder %s16, 0
    %p92 = por %p90, %p91
    %s93 = ssub.s32 %s18, %s32
    %p94 = scmp.eq.s32.totalorder %s93, 0
    %s96 = sadd.s32 %s95, 1
    %s97 = scalar_select %p94, %s95, %s96
    %p100 = pneg %p94
    %p101 = scmp.eq.s32.totalorder %s10, 3
    %p102 = por %p100, %p101
    %p103 = scmp.ne.s32.totalorder %s95, %s98
    %p104 = scmp.eq.s32.totalorder %s10, 0
    %p105 = por %p103, %p104
    %p106 = scmp.ne.s32.totalorder %s95, %s98
    %p107 = scmp.eq.s32.totalorder %s15, 3
    %p108 = por %p106, %p107
    %p109 = scmp.ne.s32.totalorder %s98, %s99
    %p110 = scmp.eq.s32.totalorder %s15, 0
    %p111 = por %p109, %p110
    %p112 = scmp.ne.s32.totalorder %s98, %s99
    %p113 = scmp.eq.s32.totalorder %s16, 3
    %p114 = por %p112, %p113
    %p116 = scmp.ne.s32.totalorder %s99, %s115
    %p117 = scmp.eq.s32.totalorder %s16, 0
    %p118 = por %p116, %p117
    %s119 = ssub.s32 %s18, %s32
    %p120 = scmp.eq.s32.totalorder %s119, 0
    %s122 = sadd.s32 %s121, 1
    %s123 = scalar_select %p120, %s121, %s122
    %p126 = pneg %p120
    %p127 = scmp.eq.s32.totalorder %s10, 3
    %p128 = por %p126, %p127
    %p129 = scmp.ne.s32.totalorder %s121, %s124
    %p130 = scmp.eq.s32.totalorder %s10, 0
    %p131 = por %p129, %p130
    %p132 = scmp.ne.s32.totalorder %s121, %s124
    %p133 = scmp.eq.s32.totalorder %s15, 3
    %p134 = por %p132, %p133
    %p135 = scmp.ne.s32.totalorder %s124, %s125
    %p136 = scmp.eq.s32.totalorder %s15, 0
    %p137 = por %p135, %p136
    %p138 = scmp.ne.s32.totalorder %s124, %s125
    %p139 = scmp.eq.s32.totalorder %s16, 3
    %p140 = por %p138, %p139
    %p142 = scmp.ne.s32.totalorder %s125, %s141
    %p143 = scmp.eq.s32.totalorder %s16, 0
    %p144 = por %p142, %p143
    %s145 = ssub.s32 %s17, %s36
    %s146 = ssub.s32 %s18, %s32
    %s147 = sor.u32 %s145, %s146
    %p148 = scmp.eq.s32.totalorder %s147, 0
    %s150 = sadd.s32 %s149, 1
    %s151 = scalar_select %p148, %s149, %s150
    %p154 = pneg %p148
    %p155 = scmp.eq.s32.totalorder %s10, 3
    %p156 = por %p154, %p155
    %p157 = scmp.ne.s32.totalorder %s149, %s152
    %p158 = scmp.eq.s32.totalorder %s10, 0
    %p159 = por %p157, %p158
    %p160 = scmp.ne.s32.totalorder %s149, %s152
    %p161 = scmp.eq.s32.totalorder %s15, 3
    %p162 = por %p160, %p161
    %p163 = scmp.ne.s32.totalorder %s152, %s153
    %p164 = scmp.eq.s32.totalorder %s15, 0
    %p165 = por %p163, %p164
    %p166 = scmp.ne.s32.totalorder %s152, %s153
    %p167 = scmp.eq.s32.totalorder %s16, 3
    %p168 = por %p166, %p167
    %p170 = scmp.ne.s32.totalorder %s153, %s169
    %p171 = scmp.eq.s32.totalorder %s16, 0
    %p172 = por %p170, %p171
    %p173 = scmp.le.s32.totalorder 1, %s10
    %p174 = scmp.lt.s32.totalorder %s10, 5
    %p175 = pnand %p173, %p174
    %p176 = pneg %p175
    // Predicated region
    $region9: #{matmul_affine.1} parent=5 // pred_check
      _
    $region10: #{matmul_affine.1} parent=5 // pred_check_branch
      %178 = sbr.rel (%p175) target = $region12
    $region11: #{matmul_affine.1} parent=5 // pred_region
      %s179 = ssub.s32 %s10, 1
      // Predicated region
      $region13: #{matmul_affine.1} parent=11 // pred_check
        %p180 = pneg %p85
      $region14: #{matmul_affine.1} parent=11 // pred_check_branch
        %182 = sbr.rel (%p180) target = $region16
      $region15: #{matmul_affine.1} parent=11 // pred_region
        %s183 = smul.u32 19, %s22
        %p184 = scmp.lt.s32.totalorder %s183, 18
        %s185 = scalar_select %p184, %s183, 18
        %p186 = scmp.lt.s32.totalorder %s21, 0
        %s187 = scalar_select %p186, %s21, 0
        %s188 = sadd.s32 %s187, %s185
        %s189 = smul.addr %s188, 4
        %s190 = scalar_lea.vmem %s1, %s189
        %s191 = smul.u32 19, %s22
      $region16: #{matmul_affine.1} parent=11 // pred_fallthru
        _
      // Predicated region
      $region17: #{matmul_affine.1} parent=11 // pred_check
        %p192 = pneg %p111
      $region18: #{matmul_affine.1} parent=11 // pred_check_branch
        %194 = sbr.rel (%p192) target = $region20
      $region19: #{matmul_affine.1} parent=11 // pred_region
        %p195 = scmp.lt.s32.totalorder %s21, 0
        %s196 = scalar_select %p195, %s21, 0
        %s197 = scalar_lea.vmem %s2, %s196
      $region20: #{matmul_affine.1} parent=11 // pred_fallthru
        _
      // Predicated region
      $region21: #{matmul_affine.1} parent=11 // pred_check
        %p198 = pneg %p137
      $region22: #{matmul_affine.1} parent=11 // pred_check_branch
        %200 = sbr.rel (%p198) target = $region24
      $region23: #{matmul_affine.1} parent=11 // pred_region
        %p201 = scmp.lt.s32.totalorder %s21, 0
        %s202 = scalar_select %p201, %s21, 0
        %s203 = scalar_lea.vmem %s3, %s202
      $region24: #{matmul_affine.1} parent=11 // pred_fallthru
        _
    $region12: #{matmul_affine.1} parent=5 // pred_fallthru
      _
    %p204 = scmp.lt.s32.totalorder %s10, 4
    // Predicated region
    $region25: #{matmul_affine.1} parent=5 // pred_check
      %p205 = pneg %p204
    $region26: #{matmul_affine.1} parent=5 // pred_check_branch
      %207 = sbr.rel (%p205) target = $region28
    $region27: #{matmul_affine.1} parent=5 // pred_region
      // Predicated region
      $region29: #{matmul_affine.1} parent=27 // pred_check
        %p208 = pneg %p51
      $region30: #{matmul_affine.1} parent=27 // pred_check_branch
        %210 = sbr.rel (%p208) target = $region32
      $region31: #{matmul_affine.1} parent=27 // pred_region
        %s211 = smul.u32 64, %s17
        %s212 = smul.u32 2, %s19
        %p213 = scmp.lt.s32.totalorder %s211, 255
        %s214 = scalar_select %p213, %s211, 255
        %p215 = scmp.lt.s32.totalorder %s212, 1
        %s216 = scalar_select %p215, %s212, 1
        %s217 = smul.addr %s214, 2
        %s218 = sadd.s32 %s216, %s217
        %s219 = smul.addr %s218, 4
        %s220 = scalar_lea.vmem %s0, %s219
        %s221 = smul.u32 64, %s17
        %s222 = smul.u32 2, %s19
      $region32: #{matmul_affine.1} parent=27 // pred_fallthru
        _
    $region28: #{matmul_affine.1} parent=5 // pred_fallthru
      _
    %p223 = scmp.le.s32.totalorder 1, %s10
    %p224 = scmp.lt.s32.totalorder %s10, 5
    %p225 = pnand %p223, %p224
    %p226 = pneg %p225
    // Predicated region
    $region33: #{matmul_affine.1} parent=5 // pred_check
      _
    $region34: #{matmul_affine.1} parent=5 // pred_check_branch
      %228 = sbr.rel (%p225) target = $region36
    $region35: #{matmul_affine.1} parent=5 // pred_region
      %s229 = ssub.s32 %s10, 1
      %s230 = smul.u32 64, %s20
      %s231 = smul.u32 2, %s22
      %p232 = scmp.lt.s32.totalorder %s230, 255
      %s233 = scalar_select %p232, %s230, 255
      %p234 = scmp.lt.s32.totalorder %s231, 1
      %s235 = scalar_select %p234, %s231, 1
      %s236 = smul.addr %s233, 2
      %s237 = sadd.s32 %s235, %s236
      %s238 = smul.addr %s237, 4
      %s239 = scalar_lea.vmem %s0, %s238
      %p240 = pneg %p57
      %p241 = pneg %p54
      %s242 = smul.u32 19, %s22
      %p243 = scmp.lt.s32.totalorder %s242, 18
      %s244 = scalar_select %p243, %s242, 18
      %p245 = scmp.lt.s32.totalorder %s21, 0
      %s246 = scalar_select %p245, %s21, 0
      %s247 = sadd.s32 %s246, %s244
      %s248 = smul.addr %s247, 4
      %s249 = scalar_lea.vmem %s1, %s248
      %p250 = pneg %p85
      %p251 = pneg %p82
      %p252 = scmp.lt.s32.totalorder %s21, 0
      %s253 = scalar_select %p252, %s21, 0
      %s254 = scalar_lea.vmem %s2, %s253
      %p255 = pneg %p111
      %p256 = pneg %p108
      %p257 = scmp.lt.s32.totalorder %s21, 0
      %s258 = scalar_select %p257, %s21, 0
      %s259 = scalar_lea.vmem %s3, %s258
      %p260 = pneg %p137
      %p261 = pneg %p134
      %p262 = pneg %p165
      %p263 = pneg %p162
      %s264 = smul.u32 64, %s20
      %p265 = scmp.lt.s32.totalorder %s264, 255
      %s266 = scalar_select %p265, %s264, 255
      %p267 = scmp.lt.s32.totalorder %s21, 0
      %s268 = scalar_select %p267, %s21, 0
      %s269 = sadd.s32 %s268, %s266
      %s270 = smul.addr %s269, 4
      %s271 = scalar_lea.vmem %s4, %s270
      %s272 = smul.u32 64, %s20
      %s273 = smul.u32 2, %s22
      %p274 = scmp.lt.s32.totalorder %s272, 255
      %s275 = scalar_select %p274, %s272, 255
      %p276 = scmp.lt.s32.totalorder %s273, 1
      %s277 = scalar_select %p276, %s273, 1
      %s278 = smul.addr %s275, 2
      %s279 = sadd.s32 %s277, %s278
      %s280 = smul.addr %s279, 4
      %s281 = scalar_lea.vmem %s0, %s280
      %s282 = smul.u32 64, %s20
      %s283 = smul.u32 2, %s22
      %s284 = smul.u32 19, %s22
      %p285 = scmp.lt.s32.totalorder %s284, 18
      %s286 = scalar_select %p285, %s284, 18
      %p287 = scmp.lt.s32.totalorder %s21, 0
      %s288 = scalar_select %p287, %s21, 0
      %s289 = sadd.s32 %s288, %s286
      %s290 = smul.addr %s289, 4
      %s291 = scalar_lea.vmem %s1, %s290
      %s292 = smul.u32 19, %s22
      %p293 = scmp.lt.s32.totalorder %s21, 0
      %s294 = scalar_select %p293, %s21, 0
      %s295 = scalar_lea.vmem %s2, %s294
      %p296 = scmp.lt.s32.totalorder %s21, 0
      %s297 = scalar_select %p296, %s21, 0
      %s298 = scalar_lea.vmem %s3, %s297
      %s299 = smul.u32 64, %s20
      %p300 = scmp.lt.s32.totalorder %s299, 255
      %s301 = scalar_select %p300, %s299, 255
      %p302 = scmp.lt.s32.totalorder %s21, 0
      %s303 = scalar_select %p302, %s21, 0
      %s304 = sadd.s32 %s303, %s301
      %s305 = smul.addr %s304, 4
      %s306 = scalar_lea.vmem %s4, %s305
      %s307 = smul.u32 64, %s20
      %p309 = scmp.eq.s32.totalorder %s22, 0
      // Predicated region
      $region37: #{matmul_affine.1} parent=35 // pred_check
        %p310 = pneg %p309
      $region38: #{matmul_affine.1} parent=35 // pred_check_branch
        %312 = sbr.rel (%p310) target = $region40
      $region39: #{matmul_affine.1} parent=35 // pred_region
        %vm313 = vcmask 523264
        %314 = vst.msk [vmem:[#allocation2] sm:$0xff] %vm313, 0.0
        %315 = vst.msk [vmem:[#allocation2 + $0x8] sm:$0xff] %vm313, 0.0
        %316 = vst.msk [vmem:[#allocation2 + $0x10] sm:$0xff] %vm313, 0.0
        %317 = vst.msk [vmem:[#allocation2 + $0x18] sm:$0xff] %vm313, 0.0
        %318 = vst.msk [vmem:[#allocation2 + $0x20] sm:$0xff] %vm313, 0.0
        %319 = vst.msk [vmem:[#allocation2 + $0x28] sm:$0xff] %vm313, 0.0
        %320 = vst.msk [vmem:[#allocation2 + $0x30] sm:$0xff] %vm313, 0.0
        %321 = vst.msk [vmem:[#allocation2 + $0x38] sm:$0xff] %vm313, 0.0
        %322 = vst.msk [vmem:[#allocation2 + $0x40] sm:$0xff] %vm313, 0.0
        %323 = vst.msk [vmem:[#allocation2 + $0x48] sm:$0xff] %vm313, 0.0
        %324 = vst.msk [vmem:[#allocation2 + $0x50] sm:$0xff] %vm313, 0.0
        %325 = vst.msk [vmem:[#allocation2 + $0x58] sm:$0xff] %vm313, 0.0
        %326 = vst.msk [vmem:[#allocation2 + $0x60] sm:$0xff] %vm313, 0.0
        %327 = vst.msk [vmem:[#allocation2 + $0x68] sm:$0xff] %vm313, 0.0
        %328 = vst.msk [vmem:[#allocation2 + $0x70] sm:$0xff] %vm313, 0.0
        %329 = vst.msk [vmem:[#allocation2 + $0x78] sm:$0xff] %vm313, 0.0
        %330 = vst.msk [vmem:[#allocation2 + $0x80] sm:$0xff] %vm313, 0.0
        %331 = vst.msk [vmem:[#allocation2 + $0x88] sm:$0xff] %vm313, 0.0
        %332 = vst.msk [vmem:[#allocation2 + $0x90] sm:$0xff] %vm313, 0.0
        %333 = vst.msk [vmem:[#allocation2 + $0x98] sm:$0xff] %vm313, 0.0
        %334 = vst.msk [vmem:[#allocation2 + $0xa0] sm:$0xff] %vm313, 0.0
        %335 = vst.msk [vmem:[#allocation2 + $0xa8] sm:$0xff] %vm313, 0.0
        %336 = vst.msk [vmem:[#allocation2 + $0xb0] sm:$0xff] %vm313, 0.0
        %337 = vst.msk [vmem:[#allocation2 + $0xb8] sm:$0xff] %vm313, 0.0
        %338 = vst.msk [vmem:[#allocation2 + $0xc0] sm:$0xff] %vm313, 0.0
        %339 = vst.msk [vmem:[#allocation2 + $0xc8] sm:$0xff] %vm313, 0.0
        %340 = vst.msk [vmem:[#allocation2 + $0xd0] sm:$0xff] %vm313, 0.0
        %341 = vst.msk [vmem:[#allocation2 + $0xd8] sm:$0xff] %vm313, 0.0
        %342 = vst.msk [vmem:[#allocation2 + $0xe0] sm:$0xff] %vm313, 0.0
        %343 = vst.msk [vmem:[#allocation2 + $0xe8] sm:$0xff] %vm313, 0.0
        %344 = vst.msk [vmem:[#allocation2 + $0xf0] sm:$0xff] %vm313, 0.0
        %345 = vst.msk [vmem:[#allocation2 + $0xf8] sm:$0xff] %vm313, 0.0
        %346 = vst.msk [vmem:[#allocation2 + $0x100] sm:$0xff] %vm313, 0.0
        %347 = vst.msk [vmem:[#allocation2 + $0x108] sm:$0xff] %vm313, 0.0
        %348 = vst.msk [vmem:[#allocation2 + $0x110] sm:$0xff] %vm313, 0.0
        %349 = vst.msk [vmem:[#allocation2 + $0x118] sm:$0xff] %vm313, 0.0
        %350 = vst.msk [vmem:[#allocation2 + $0x120] sm:$0xff] %vm313, 0.0
        %351 = vst.msk [vmem:[#allocation2 + $0x128] sm:$0xff] %vm313, 0.0
        %352 = vst.msk [vmem:[#allocation2 + $0x130] sm:$0xff] %vm313, 0.0
        %353 = vst.msk [vmem:[#allocation2 + $0x138] sm:$0xff] %vm313, 0.0
        %354 = vst.msk [vmem:[#allocation2 + $0x140] sm:$0xff] %vm313, 0.0
        %355 = vst.msk [vmem:[#allocation2 + $0x148] sm:$0xff] %vm313, 0.0
        %356 = vst.msk [vmem:[#allocation2 + $0x150] sm:$0xff] %vm313, 0.0
        %357 = vst.msk [vmem:[#allocation2 + $0x158] sm:$0xff] %vm313, 0.0
        %358 = vst.msk [vmem:[#allocation2 + $0x160] sm:$0xff] %vm313, 0.0
        %359 = vst.msk [vmem:[#allocation2 + $0x168] sm:$0xff] %vm313, 0.0
        %360 = vst.msk [vmem:[#allocation2 + $0x170] sm:$0xff] %vm313, 0.0
        %361 = vst.msk [vmem:[#allocation2 + $0x178] sm:$0xff] %vm313, 0.0
        %362 = vst.msk [vmem:[#allocation2 + $0x180] sm:$0xff] %vm313, 0.0
        %363 = vst.msk [vmem:[#allocation2 + $0x188] sm:$0xff] %vm313, 0.0
        %364 = vst.msk [vmem:[#allocation2 + $0x190] sm:$0xff] %vm313, 0.0
        %365 = vst.msk [vmem:[#allocation2 + $0x198] sm:$0xff] %vm313, 0.0
        %366 = vst.msk [vmem:[#allocation2 + $0x1a0] sm:$0xff] %vm313, 0.0
        %367 = vst.msk [vmem:[#allocation2 + $0x1a8] sm:$0xff] %vm313, 0.0
        %368 = vst.msk [vmem:[#allocation2 + $0x1b0] sm:$0xff] %vm313, 0.0
        %369 = vst.msk [vmem:[#allocation2 + $0x1b8] sm:$0xff] %vm313, 0.0
        %370 = vst.msk [vmem:[#allocation2 + $0x1c0] sm:$0xff] %vm313, 0.0
        %371 = vst.msk [vmem:[#allocation2 + $0x1c8] sm:$0xff] %vm313, 0.0
        %372 = vst.msk [vmem:[#allocation2 + $0x1d0] sm:$0xff] %vm313, 0.0
        %373 = vst.msk [vmem:[#allocation2 + $0x1d8] sm:$0xff] %vm313, 0.0
        %374 = vst.msk [vmem:[#allocation2 + $0x1e0] sm:$0xff] %vm313, 0.0
        %375 = vst.msk [vmem:[#allocation2 + $0x1e8] sm:$0xff] %vm313, 0.0
        %376 = vst.msk [vmem:[#allocation2 + $0x1f0] sm:$0xff] %vm313, 0.0
        %377 = vst.msk [vmem:[#allocation2 + $0x1f8] sm:$0xff] %vm313, 0.0
      $region40: #{matmul_affine.1} parent=35 // pred_fallthru
        _
      %v378 = vld [vmem:[#allocation2] sm:$0xff]
      %v379 = vld [vmem:[#allocation2 + $0x8] sm:$0xff]
      %v380 = vld [vmem:[#allocation2 + $0x10] sm:$0xff]
      %v381 = vld [vmem:[#allocation2 + $0x18] sm:$0xff]
      %v382 = vld [vmem:[#allocation2 + $0x20] sm:$0xff]
      %v383 = vld [vmem:[#allocation2 + $0x28] sm:$0xff]
      %v384 = vld [vmem:[#allocation2 + $0x30] sm:$0xff]
      %v385 = vld [vmem:[#allocation2 + $0x38] sm:$0xff]
      %v386 = vld [vmem:[#allocation2 + $0x40] sm:$0xff]
      %v387 = vld [vmem:[#allocation2 + $0x48] sm:$0xff]
      %v388 = vld [vmem:[#allocation2 + $0x50] sm:$0xff]
      %v389 = vld [vmem:[#allocation2 + $0x58] sm:$0xff]
      %v390 = vld [vmem:[#allocation2 + $0x60] sm:$0xff]
      %v391 = vld [vmem:[#allocation2 + $0x68] sm:$0xff]
      %v392 = vld [vmem:[#allocation2 + $0x70] sm:$0xff]
      %v393 = vld [vmem:[#allocation2 + $0x78] sm:$0xff]
      %v394 = vld [vmem:[#allocation2 + $0x80] sm:$0xff]
      %v395 = vld [vmem:[#allocation2 + $0x88] sm:$0xff]
      %v396 = vld [vmem:[#allocation2 + $0x90] sm:$0xff]
      %v397 = vld [vmem:[#allocation2 + $0x98] sm:$0xff]
      %v398 = vld [vmem:[#allocation2 + $0xa0] sm:$0xff]
      %v399 = vld [vmem:[#allocation2 + $0xa8] sm:$0xff]
      %v400 = vld [vmem:[#allocation2 + $0xb0] sm:$0xff]
      %v401 = vld [vmem:[#allocation2 + $0xb8] sm:$0xff]
      %v402 = vld [vmem:[#allocation2 + $0xc0] sm:$0xff]
      %v403 = vld [vmem:[#allocation2 + $0xc8] sm:$0xff]
      %v404 = vld [vmem:[#allocation2 + $0xd0] sm:$0xff]
      %v405 = vld [vmem:[#allocation2 + $0xd8] sm:$0xff]
      %v406 = vld [vmem:[#allocation2 + $0xe0] sm:$0xff]
      %v407 = vld [vmem:[#allocation2 + $0xe8] sm:$0xff]
      %v408 = vld [vmem:[#allocation2 + $0xf0] sm:$0xff]
      %v409 = vld [vmem:[#allocation2 + $0xf8] sm:$0xff]
      %v410 = vld [vmem:[#allocation2 + $0x100] sm:$0xff]
      %v411 = vld [vmem:[#allocation2 + $0x108] sm:$0xff]
      %v412 = vld [vmem:[#allocation2 + $0x110] sm:$0xff]
      %v413 = vld [vmem:[#allocation2 + $0x118] sm:$0xff]
      %v414 = vld [vmem:[#allocation2 + $0x120] sm:$0xff]
      %v415 = vld [vmem:[#allocation2 + $0x128] sm:$0xff]
      %v416 = vld [vmem:[#allocation2 + $0x130] sm:$0xff]
      %v417 = vld [vmem:[#allocation2 + $0x138] sm:$0xff]
      %v418 = vld [vmem:[#allocation2 + $0x140] sm:$0xff]
      %v419 = vld [vmem:[#allocation2 + $0x148] sm:$0xff]
      %v420 = vld [vmem:[#allocation2 + $0x150] sm:$0xff]
      %v421 = vld [vmem:[#allocation2 + $0x158] sm:$0xff]
      %v422 = vld [vmem:[#allocation2 + $0x160] sm:$0xff]
      %v423 = vld [vmem:[#allocation2 + $0x168] sm:$0xff]
      %v424 = vld [vmem:[#allocation2 + $0x170] sm:$0xff]
      %v425 = vld [vmem:[#allocation2 + $0x178] sm:$0xff]
      %v426 = vld [vmem:[#allocation2 + $0x180] sm:$0xff]
      %v427 = vld [vmem:[#allocation2 + $0x188] sm:$0xff]
      %v428 = vld [vmem:[#allocation2 + $0x190] sm:$0xff]
      %v429 = vld [vmem:[#allocation2 + $0x198] sm:$0xff]
      %v430 = vld [vmem:[#allocation2 + $0x1a0] sm:$0xff]
      %v431 = vld [vmem:[#allocation2 + $0x1a8] sm:$0xff]
      %v432 = vld [vmem:[#allocation2 + $0x1b0] sm:$0xff]
      %v433 = vld [vmem:[#allocation2 + $0x1b8] sm:$0xff]
      %v434 = vld [vmem:[#allocation2 + $0x1c0] sm:$0xff]
      %v435 = vld [vmem:[#allocation2 + $0x1c8] sm:$0xff]
      %v436 = vld [vmem:[#allocation2 + $0x1d0] sm:$0xff]
      %v437 = vld [vmem:[#allocation2 + $0x1d8] sm:$0xff]
      %v438 = vld [vmem:[#allocation2 + $0x1e0] sm:$0xff]
      %v439 = vld [vmem:[#allocation2 + $0x1e8] sm:$0xff]
      %v440 = vld [vmem:[#allocation2 + $0x1f0] sm:$0xff]
      %v441 = vld [vmem:[#allocation2 + $0x1f8] sm:$0xff]
      %v442 = vld [vmem:[%s281] sm:$0xff]
      %v443 = vld [vmem:[%s281 + $0x8] sm:$0xff]
      %v444 = vld [vmem:[%s281 + $0x10] sm:$0xff]
      %v445 = vld [vmem:[%s281 + $0x18] sm:$0xff]
      %v446 = vld [vmem:[%s281 + $0x20] sm:$0xff]
      %v447 = vld [vmem:[%s281 + $0x28] sm:$0xff]
      %v448 = vld [vmem:[%s281 + $0x30] sm:$0xff]
      %v449 = vld [vmem:[%s281 + $0x38] sm:$0xff]
      %v450 = vld [vmem:[%s281 + $0x40] sm:$0xff]
      %v451 = vld [vmem:[%s281 + $0x48] sm:$0xff]
      %v452 = vld [vmem:[%s281 + $0x50] sm:$0xff]
      %v453 = vld [vmem:[%s281 + $0x58] sm:$0xff]
      %v454 = vld [vmem:[%s281 + $0x60] sm:$0xff]
      %v455 = vld [vmem:[%s281 + $0x68] sm:$0xff]
      %v456 = vld [vmem:[%s281 + $0x70] sm:$0xff]
      %v457 = vld [vmem:[%s281 + $0x78] sm:$0xff]
      %v458 = vld [vmem:[%s281 + $0x80] sm:$0xff]
      %v459 = vld [vmem:[%s281 + $0x88] sm:$0xff]
      %v460 = vld [vmem:[%s281 + $0x90] sm:$0xff]
      %v461 = vld [vmem:[%s281 + $0x98] sm:$0xff]
      %v462 = vld [vmem:[%s281 + $0xa0] sm:$0xff]
      %v463 = vld [vmem:[%s281 + $0xa8] sm:$0xff]
      %v464 = vld [vmem:[%s281 + $0xb0] sm:$0xff]
      %v465 = vld [vmem:[%s281 + $0xb8] sm:$0xff]
      %v466 = vld [vmem:[%s281 + $0xc0] sm:$0xff]
      %v467 = vld [vmem:[%s281 + $0xc8] sm:$0xff]
      %v468 = vld [vmem:[%s281 + $0xd0] sm:$0xff]
      %v469 = vld [vmem:[%s281 + $0xd8] sm:$0xff]
      %v470 = vld [vmem:[%s281 + $0xe0] sm:$0xff]
      %v471 = vld [vmem:[%s281 + $0xe8] sm:$0xff]
      %v472 = vld [vmem:[%s281 + $0xf0] sm:$0xff]
      %v473 = vld [vmem:[%s281 + $0xf8] sm:$0xff]
      %v474 = vld [vmem:[%s281 + $0x100] sm:$0xff]
      %v475 = vld [vmem:[%s281 + $0x108] sm:$0xff]
      %v476 = vld [vmem:[%s281 + $0x110] sm:$0xff]
      %v477 = vld [vmem:[%s281 + $0x118] sm:$0xff]
      %v478 = vld [vmem:[%s281 + $0x120] sm:$0xff]
      %v479 = vld [vmem:[%s281 + $0x128] sm:$0xff]
      %v480 = vld [vmem:[%s281 + $0x130] sm:$0xff]
      %v481 = vld [vmem:[%s281 + $0x138] sm:$0xff]
      %v482 = vld [vmem:[%s281 + $0x140] sm:$0xff]
      %v483 = vld [vmem:[%s281 + $0x148] sm:$0xff]
      %v484 = vld [vmem:[%s281 + $0x150] sm:$0xff]
      %v485 = vld [vmem:[%s281 + $0x158] sm:$0xff]
      %v486 = vld [vmem:[%s281 + $0x160] sm:$0xff]
      %v487 = vld [vmem:[%s281 + $0x168] sm:$0xff]
      %v488 = vld [vmem:[%s281 + $0x170] sm:$0xff]
      %v489 = vld [vmem:[%s281 + $0x178] sm:$0xff]
      %v490 = vld [vmem:[%s281 + $0x180] sm:$0xff]
      %v491 = vld [vmem:[%s281 + $0x188] sm:$0xff]
      %v492 = vld [vmem:[%s281 + $0x190] sm:$0xff]
      %v493 = vld [vmem:[%s281 + $0x198] sm:$0xff]
      %v494 = vld [vmem:[%s281 + $0x1a0] sm:$0xff]
      %v495 = vld [vmem:[%s281 + $0x1a8] sm:$0xff]
      %v496 = vld [vmem:[%s281 + $0x1b0] sm:$0xff]
      %v497 = vld [vmem:[%s281 + $0x1b8] sm:$0xff]
      %v498 = vld [vmem:[%s281 + $0x1c0] sm:$0xff]
      %v499 = vld [vmem:[%s281 + $0x1c8] sm:$0xff]
      %v500 = vld [vmem:[%s281 + $0x1d0] sm:$0xff]
      %v501 = vld [vmem:[%s281 + $0x1d8] sm:$0xff]
      %v502 = vld [vmem:[%s281 + $0x1e0] sm:$0xff]
      %v503 = vld [vmem:[%s281 + $0x1e8] sm:$0xff]
      %v504 = vld [vmem:[%s281 + $0x1f0] sm:$0xff]
      %v505 = vld [vmem:[%s281 + $0x1f8] sm:$0xff]
      %v506 = vld [vmem:[%s291] sm:$0xf]
      %v507 = vld [vmem:[%s291 + $0x4] sm:$0xf]
      %v508 = vld [vmem:[%s291 + $0x8] sm:$0xf]
      %v509 = vld [vmem:[%s291 + $0xc] sm:$0xf]
      %v510 = vld [vmem:[%s291 + $0x10] sm:$0xf]
      %v511 = vld [vmem:[%s291 + $0x14] sm:$0xf]
      %v512 = vld [vmem:[%s291 + $0x18] sm:$0xf]
      %v513 = vld [vmem:[%s291 + $0x1c] sm:$0xf]
      %v514 = vld [vmem:[%s291 + $0x20] sm:$0xf]
      %v515 = vld [vmem:[%s291 + $0x24] sm:$0xf]
      %v516 = vld [vmem:[%s291 + $0x28] sm:$0xf]
      %v517 = vld [vmem:[%s291 + $0x2c] sm:$0xf]
      %v518 = vld [vmem:[%s291 + $0x30] sm:$0xf]
      %v519 = vld [vmem:[%s291 + $0x34] sm:$0xf]
      %v520 = vld [vmem:[%s291 + $0x38] sm:$0xf]
      %v521 = vld [vmem:[%s291 + $0x3c] sm:$0xf]
      %v522 = vld [vmem:[%s291 + $0x40] sm:$0xf]
      %v523 = vld [vmem:[%s291 + $0x44] sm:$0xf]
      %v524 = vld [vmem:[%s291 + $0x48] sm:$0x3]
      %v589 = vunpack.c.l.b16 %v442
      %v590 = vunpack.c.h.b16 %v442
      %v591 = vunpack.c.l.b16 %v443
      %v592 = vunpack.c.h.b16 %v443
      %v593 = vunpack.c.l.b16 %v444
      %v594 = vunpack.c.h.b16 %v444
      %v595 = vunpack.c.l.b16 %v445
      %v596 = vunpack.c.h.b16 %v445
      %v597 = vunpack.c.l.b16 %v446
      %v598 = vunpack.c.h.b16 %v446
      %v599 = vunpack.c.l.b16 %v447
      %v600 = vunpack.c.h.b16 %v447
      %v601 = vunpack.c.l.b16 %v448
      %v602 = vunpack.c.h.b16 %v448
      %v603 = vunpack.c.l.b16 %v449
      %v604 = vunpack.c.h.b16 %v449
      %v605 = vunpack.c.l.b16 %v450
      %v606 = vunpack.c.h.b16 %v450
      %v607 = vunpack.c.l.b16 %v451
      %v608 = vunpack.c.h.b16 %v451
      %v609 = vunpack.c.l.b16 %v452
      %v610 = vunpack.c.h.b16 %v452
      %v611 = vunpack.c.l.b16 %v453
      %v612 = vunpack.c.h.b16 %v453
      %v613 = vunpack.c.l.b16 %v454
      %v614 = vunpack.c.h.b16 %v454
      %v615 = vunpack.c.l.b16 %v455
      %v616 = vunpack.c.h.b16 %v455
      %v617 = vunpack.c.l.b16 %v456
      %v618 = vunpack.c.h.b16 %v456
      %v619 = vunpack.c.l.b16 %v457
      %v620 = vunpack.c.h.b16 %v457
      %v621 = vunpack.c.l.b16 %v458
      %v622 = vunpack.c.h.b16 %v458
      %v623 = vunpack.c.l.b16 %v459
      %v624 = vunpack.c.h.b16 %v459
      %v625 = vunpack.c.l.b16 %v460
      %v626 = vunpack.c.h.b16 %v460
      %v627 = vunpack.c.l.b16 %v461
      %v628 = vunpack.c.h.b16 %v461
      %v629 = vunpack.c.l.b16 %v462
      %v630 = vunpack.c.h.b16 %v462
      %v631 = vunpack.c.l.b16 %v463
      %v632 = vunpack.c.h.b16 %v463
      %v633 = vunpack.c.l.b16 %v464
      %v634 = vunpack.c.h.b16 %v464
      %v635 = vunpack.c.l.b16 %v465
      %v636 = vunpack.c.h.b16 %v465
      %v637 = vunpack.c.l.b16 %v466
      %v638 = vunpack.c.h.b16 %v466
      %v639 = vunpack.c.l.b16 %v467
      %v640 = vunpack.c.h.b16 %v467
      %v641 = vunpack.c.l.b16 %v468
      %v642 = vunpack.c.h.b16 %v468
      %v643 = vunpack.c.l.b16 %v469
      %v644 = vunpack.c.h.b16 %v469
      %v645 = vunpack.c.l.b16 %v470
      %v646 = vunpack.c.h.b16 %v470
      %v647 = vunpack.c.l.b16 %v471
      %v648 = vunpack.c.h.b16 %v471
      %v649 = vunpack.c.l.b16 %v472
      %v650 = vunpack.c.h.b16 %v472
      %v651 = vunpack.c.l.b16 %v473
      %v652 = vunpack.c.h.b16 %v473
      %v653 = vunpack.c.l.b16 %v474
      %v654 = vunpack.c.h.b16 %v474
      %v655 = vunpack.c.l.b16 %v475
      %v656 = vunpack.c.h.b16 %v475
      %v657 = vunpack.c.l.b16 %v476
      %v658 = vunpack.c.h.b16 %v476
      %v659 = vunpack.c.l.b16 %v477
      %v660 = vunpack.c.h.b16 %v477
      %v661 = vunpack.c.l.b16 %v478
      %v662 = vunpack.c.h.b16 %v478
      %v663 = vunpack.c.l.b16 %v479
      %v664 = vunpack.c.h.b16 %v479
      %v665 = vunpack.c.l.b16 %v480
      %v666 = vunpack.c.h.b16 %v480
      %v667 = vunpack.c.l.b16 %v481
      %v668 = vunpack.c.h.b16 %v481
      %v669 = vunpack.c.l.b16 %v482
      %v670 = vunpack.c.h.b16 %v482
      %v671 = vunpack.c.l.b16 %v483
      %v672 = vunpack.c.h.b16 %v483
      %v673 = vunpack.c.l.b16 %v484
      %v674 = vunpack.c.h.b16 %v484
      %v675 = vunpack.c.l.b16 %v485
      %v676 = vunpack.c.h.b16 %v485
      %v677 = vunpack.c.l.b16 %v486
      %v678 = vunpack.c.h.b16 %v486
      %v679 = vunpack.c.l.b16 %v487
      %v680 = vunpack.c.h.b16 %v487
      %v681 = vunpack.c.l.b16 %v488
      %v682 = vunpack.c.h.b16 %v488
      %v683 = vunpack.c.l.b16 %v489
      %v684 = vunpack.c.h.b16 %v489
      %v685 = vunpack.c.l.b16 %v490
      %v686 = vunpack.c.h.b16 %v490
      %v687 = vunpack.c.l.b16 %v491
      %v688 = vunpack.c.h.b16 %v491
      %v689 = vunpack.c.l.b16 %v492
      %v690 = vunpack.c.h.b16 %v492
      %v691 = vunpack.c.l.b16 %v493
      %v692 = vunpack.c.h.b16 %v493
      %v693 = vunpack.c.l.b16 %v494
      %v694 = vunpack.c.h.b16 %v494
      %v695 = vunpack.c.l.b16 %v495
      %v696 = vunpack.c.h.b16 %v495
      %v697 = vunpack.c.l.b16 %v496
      %v698 = vunpack.c.h.b16 %v496
      %v699 = vunpack.c.l.b16 %v497
      %v700 = vunpack.c.h.b16 %v497
      %v701 = vunpack.c.l.b16 %v498
      %v702 = vunpack.c.h.b16 %v498
      %v703 = vunpack.c.l.b16 %v499
      %v704 = vunpack.c.h.b16 %v499
      %v705 = vunpack.c.l.b16 %v500
      %v706 = vunpack.c.h.b16 %v500
      %v707 = vunpack.c.l.b16 %v501
      %v708 = vunpack.c.h.b16 %v501
      %v709 = vunpack.c.l.b16 %v502
      %v710 = vunpack.c.h.b16 %v502
      %v711 = vunpack.c.l.b16 %v503
      %v712 = vunpack.c.h.b16 %v503
      %v713 = vunpack.c.l.b16 %v504
      %v714 = vunpack.c.h.b16 %v504
      %v715 = vunpack.c.l.b16 %v505
      %v716 = vunpack.c.h.b16 %v505
      %v717 = vpack.c.b16 %v591, %v589
      %v718 = vpack.c.b16 %v592, %v590
      %v719 = vpack.c.b16 %v595, %v593
      %v720 = vpack.c.b16 %v596, %v594
      %v721 = vpack.c.b16 %v599, %v597
      %v722 = vpack.c.b16 %v600, %v598
      %v723 = vpack.c.b16 %v603, %v601
      %v724 = vpack.c.b16 %v604, %v602
      %v725 = vpack.c.b16 %v607, %v605
      %v726 = vpack.c.b16 %v608, %v606
      %v727 = vpack.c.b16 %v611, %v609
      %v728 = vpack.c.b16 %v612, %v610
      %v729 = vpack.c.b16 %v615, %v613
      %v730 = vpack.c.b16 %v616, %v614
      %v731 = vpack.c.b16 %v619, %v617
      %v732 = vpack.c.b16 %v620, %v618
      %v733 = vpack.c.b16 %v623, %v621
      %v734 = vpack.c.b16 %v624, %v622
      %v735 = vpack.c.b16 %v627, %v625
      %v736 = vpack.c.b16 %v628, %v626
      %v737 = vpack.c.b16 %v631, %v629
      %v738 = vpack.c.b16 %v632, %v630
      %v739 = vpack.c.b16 %v635, %v633
      %v740 = vpack.c.b16 %v636, %v634
      %v741 = vpack.c.b16 %v639, %v637
      %v742 = vpack.c.b16 %v640, %v638
      %v743 = vpack.c.b16 %v643, %v641
      %v744 = vpack.c.b16 %v644, %v642
      %v745 = vpack.c.b16 %v647, %v645
      %v746 = vpack.c.b16 %v648, %v646
      %v747 = vpack.c.b16 %v651, %v649
      %v748 = vpack.c.b16 %v652, %v650
      %v749 = vpack.c.b16 %v655, %v653
      %v750 = vpack.c.b16 %v656, %v654
      %v751 = vpack.c.b16 %v659, %v657
      %v752 = vpack.c.b16 %v660, %v658
      %v753 = vpack.c.b16 %v663, %v661
      %v754 = vpack.c.b16 %v664, %v662
      %v755 = vpack.c.b16 %v667, %v665
      %v756 = vpack.c.b16 %v668, %v666
      %v757 = vpack.c.b16 %v671, %v669
      %v758 = vpack.c.b16 %v672, %v670
      %v759 = vpack.c.b16 %v675, %v673
      %v760 = vpack.c.b16 %v676, %v674
      %v761 = vpack.c.b16 %v679, %v677
      %v762 = vpack.c.b16 %v680, %v678
      %v763 = vpack.c.b16 %v683, %v681
      %v764 = vpack.c.b16 %v684, %v682
      %v765 = vpack.c.b16 %v687, %v685
      %v766 = vpack.c.b16 %v688, %v686
      %v767 = vpack.c.b16 %v691, %v689
      %v768 = vpack.c.b16 %v692, %v690
      %v769 = vpack.c.b16 %v695, %v693
      %v770 = vpack.c.b16 %v696, %v694
      %v771 = vpack.c.b16 %v699, %v697
      %v772 = vpack.c.b16 %v700, %v698
      %v773 = vpack.c.b16 %v703, %v701
      %v774 = vpack.c.b16 %v704, %v702
      %v775 = vpack.c.b16 %v707, %v705
      %v776 = vpack.c.b16 %v708, %v706
      %v777 = vpack.c.b16 %v711, %v709
      %v778 = vpack.c.b16 %v712, %v710
      %v779 = vpack.c.b16 %v715, %v713
      %v780 = vpack.c.b16 %v716, %v714
      %v832 = vunpack.c.l.b16 %v506
      %v833 = vunpack.c.l.b16 %v507
      %v834 = vunpack.c.l.b16 %v508
      %v835 = vunpack.c.l.b16 %v509
      %v836 = vunpack.c.l.b16 %v510
      %v837 = vunpack.c.l.b16 %v511
      %v838 = vunpack.c.l.b16 %v512
      %v839 = vunpack.c.l.b16 %v513
      %v840 = vunpack.c.l.b16 %v514
      %v841 = vunpack.c.l.b16 %v515
      %v842 = vunpack.c.l.b16 %v516
      %v843 = vunpack.c.l.b16 %v517
      %v844 = vunpack.c.l.b16 %v518
      %v845 = vunpack.c.l.b16 %v519
      %v846 = vunpack.c.l.b16 %v520
      %v847 = vunpack.c.l.b16 %v521
      %v848 = vunpack.c.l.b16 %v522
      %v849 = vunpack.c.l.b16 %v523
      %v850 = vunpack.c.l.b16 %v524
      %v851 = vpack.c.b16 %v833, %v832
      %v852 = vpack.c.b16 %v835, %v834
      %v853 = vpack.c.b16 %v837, %v836
      %v854 = vpack.c.b16 %v839, %v838
      %v855 = vpack.c.b16 %v841, %v840
      %v856 = vpack.c.b16 %v843, %v842
      %v857 = vpack.c.b16 %v845, %v844
      %v858 = vpack.c.b16 %v847, %v846
      %v859 = vpack.c.b16 %v849, %v848
      %v860 = vpack.c.b16 %v850, %v850
      %vm870 = vcmask 154624
      %v872 = vsel %vm870, %v718, 0
      %v875 = vsel %vm870, %v720, 0
      %v878 = vsel %vm870, %v722, 0
      %v881 = vsel %vm870, %v724, 0
      %v884 = vsel %vm870, %v726, 0
      %v887 = vsel %vm870, %v728, 0
      %v890 = vsel %vm870, %v730, 0
      %v893 = vsel %vm870, %v732, 0
      %v896 = vsel %vm870, %v734, 0
      %v899 = vsel %vm870, %v736, 0
      %v902 = vsel %vm870, %v738, 0
      %v905 = vsel %vm870, %v740, 0
      %v908 = vsel %vm870, %v742, 0
      %v911 = vsel %vm870, %v744, 0
      %v914 = vsel %vm870, %v746, 0
      %v917 = vsel %vm870, %v748, 0
      %v920 = vsel %vm870, %v750, 0
      %v923 = vsel %vm870, %v752, 0
      %v926 = vsel %vm870, %v754, 0
      %v929 = vsel %vm870, %v756, 0
      %v932 = vsel %vm870, %v758, 0
      %v935 = vsel %vm870, %v760, 0
      %v938 = vsel %vm870, %v762, 0
      %v941 = vsel %vm870, %v764, 0
      %v944 = vsel %vm870, %v766, 0
      %v947 = vsel %vm870, %v768, 0
      %v950 = vsel %vm870, %v770, 0
      %v953 = vsel %vm870, %v772, 0
      %v956 = vsel %vm870, %v774, 0
      %v959 = vsel %vm870, %v776, 0
      %v962 = vsel %vm870, %v778, 0
      %v965 = vsel %vm870, %v780, 0
      %vm967 = vcmask 1040384
      %vm968 = vcmask 1041408
      %v969 = vsel %vm967, 4294967295, 65535
      %v970 = vsel %vm968, %v969, 0
      %v972 = vand.u32 %v860, %v970
      %974 = vmatpush.bf16.msra.mxu0 %v858
      %975 = vmatpush.bf16.msra.mxu0 %v857
      %976 = vmatpush.bf16.msra.mxu0 %v856
      %977 = vmatpush.bf16.msra.mxu0 %v855
      %978 = vmatpush.bf16.msra.mxu0 %v854
      %979 = vmatpush.bf16.msra.mxu0 %v853
      %980 = vmatpush.bf16.msra.mxu0 %v852
      %981 = vmatpush.bf16.msra.mxu0 %v851
      %982 = vmatmul.bf16.gmra.mxu0 %v717
      %v983 = vpop.f32.mrf.mxu0
      %v984 = vadd.f32 0.0, %v983
      %v985 = vpop.f32.mrf.mxu0
      %v986 = vadd.f32 0.0, %v985
      %987 = vmatmul.bf16.gmra.mxu0 %v719
      %v988 = vpop.f32.mrf.mxu0
      %v989 = vadd.f32 0.0, %v988
      %v990 = vpop.f32.mrf.mxu0
      %v991 = vadd.f32 0.0, %v990
      %992 = vmatmul.bf16.gmra.mxu0 %v721
      %v993 = vpop.f32.mrf.mxu0
      %v994 = vadd.f32 0.0, %v993
      %v995 = vpop.f32.mrf.mxu0
      %v996 = vadd.f32 0.0, %v995
      %997 = vmatmul.bf16.gmra.mxu0 %v723
      %v998 = vpop.f32.mrf.mxu0
      %v999 = vadd.f32 0.0, %v998
      %v1000 = vpop.f32.mrf.mxu0
      %v1001 = vadd.f32 0.0, %v1000
      %1002 = vmatmul.bf16.gmra.mxu0 %v725
      %v1003 = vpop.f32.mrf.mxu0
      %v1004 = vadd.f32 0.0, %v1003
      %v1005 = vpop.f32.mrf.mxu0
      %v1006 = vadd.f32 0.0, %v1005
      %1007 = vmatmul.bf16.gmra.mxu0 %v727
      %v1008 = vpop.f32.mrf.mxu0
      %v1009 = vadd.f32 0.0, %v1008
      %v1010 = vpop.f32.mrf.mxu0
      %v1011 = vadd.f32 0.0, %v1010
      %1012 = vmatmul.bf16.gmra.mxu0 %v729
      %v1013 = vpop.f32.mrf.mxu0
      %v1014 = vadd.f32 0.0, %v1013
      %v1015 = vpop.f32.mrf.mxu0
      %v1016 = vadd.f32 0.0, %v1015
      %1017 = vmatmul.bf16.gmra.mxu0 %v731
      %v1018 = vpop.f32.mrf.mxu0
      %v1019 = vadd.f32 0.0, %v1018
      %v1020 = vpop.f32.mrf.mxu0
      %v1021 = vadd.f32 0.0, %v1020
      %1022 = vmatmul.bf16.gmra.mxu0 %v733
      %v1023 = vpop.f32.mrf.mxu0
      %v1024 = vadd.f32 0.0, %v1023
      %v1025 = vpop.f32.mrf.mxu0
      %v1026 = vadd.f32 0.0, %v1025
      %1027 = vmatmul.bf16.gmra.mxu0 %v735
      %v1028 = vpop.f32.mrf.mxu0
      %v1029 = vadd.f32 0.0, %v1028
      %v1030 = vpop.f32.mrf.mxu0
      %v1031 = vadd.f32 0.0, %v1030
      %1032 = vmatmul.bf16.gmra.mxu0 %v737
      %v1033 = vpop.f32.mrf.mxu0
      %v1034 = vadd.f32 0.0, %v1033
      %v1035 = vpop.f32.mrf.mxu0
      %v1036 = vadd.f32 0.0, %v1035
      %1037 = vmatmul.bf16.gmra.mxu0 %v739
      %v1038 = vpop.f32.mrf.mxu0
      %v1039 = vadd.f32 0.0, %v1038
      %v1040 = vpop.f32.mrf.mxu0
      %v1041 = vadd.f32 0.0, %v1040
      %1042 = vmatmul.bf16.gmra.mxu0 %v741
      %v1043 = vpop.f32.mrf.mxu0
      %v1044 = vadd.f32 0.0, %v1043
      %v1045 = vpop.f32.mrf.mxu0
      %v1046 = vadd.f32 0.0, %v1045
      %1047 = vmatmul.bf16.gmra.mxu0 %v743
      %v1048 = vpop.f32.mrf.mxu0
      %v1049 = vadd.f32 0.0, %v1048
      %v1050 = vpop.f32.mrf.mxu0
      %v1051 = vadd.f32 0.0, %v1050
      %1052 = vmatmul.bf16.gmra.mxu0 %v745
      %v1053 = vpop.f32.mrf.mxu0
      %v1054 = vadd.f32 0.0, %v1053
      %v1055 = vpop.f32.mrf.mxu0
      %v1056 = vadd.f32 0.0, %v1055
      %1057 = vmatmul.bf16.gmra.mxu0 %v747
      %v1058 = vpop.f32.mrf.mxu0
      %v1059 = vadd.f32 0.0, %v1058
      %v1060 = vpop.f32.mrf.mxu0
      %v1061 = vadd.f32 0.0, %v1060
      %1062 = vmatmul.bf16.gmra.mxu0 %v749
      %v1063 = vpop.f32.mrf.mxu0
      %v1064 = vadd.f32 0.0, %v1063
      %v1065 = vpop.f32.mrf.mxu0
      %v1066 = vadd.f32 0.0, %v1065
      %1067 = vmatmul.bf16.gmra.mxu0 %v751
      %v1068 = vpop.f32.mrf.mxu0
      %v1069 = vadd.f32 0.0, %v1068
      %v1070 = vpop.f32.mrf.mxu0
      %v1071 = vadd.f32 0.0, %v1070
      %1072 = vmatmul.bf16.gmra.mxu0 %v753
      %v1073 = vpop.f32.mrf.mxu0
      %v1074 = vadd.f32 0.0, %v1073
      %v1075 = vpop.f32.mrf.mxu0
      %v1076 = vadd.f32 0.0, %v1075
      %1077 = vmatmul.bf16.gmra.mxu0 %v755
      %v1078 = vpop.f32.mrf.mxu0
      %v1079 = vadd.f32 0.0, %v1078
      %v1080 = vpop.f32.mrf.mxu0
      %v1081 = vadd.f32 0.0, %v1080
      %1082 = vmatmul.bf16.gmra.mxu0 %v757
      %v1083 = vpop.f32.mrf.mxu0
      %v1084 = vadd.f32 0.0, %v1083
      %v1085 = vpop.f32.mrf.mxu0
      %v1086 = vadd.f32 0.0, %v1085
      %1087 = vmatmul.bf16.gmra.mxu0 %v759
      %v1088 = vpop.f32.mrf.mxu0
      %v1089 = vadd.f32 0.0, %v1088
      %v1090 = vpop.f32.mrf.mxu0
      %v1091 = vadd.f32 0.0, %v1090
      %1092 = vmatmul.bf16.gmra.mxu0 %v761
      %v1093 = vpop.f32.mrf.mxu0
      %v1094 = vadd.f32 0.0, %v1093
      %v1095 = vpop.f32.mrf.mxu0
      %v1096 = vadd.f32 0.0, %v1095
      %1097 = vmatmul.bf16.gmra.mxu0 %v763
      %v1098 = vpop.f32.mrf.mxu0
      %v1099 = vadd.f32 0.0, %v1098
      %v1100 = vpop.f32.mrf.mxu0
      %v1101 = vadd.f32 0.0, %v1100
      %1102 = vmatmul.bf16.gmra.mxu0 %v765
      %v1103 = vpop.f32.mrf.mxu0
      %v1104 = vadd.f32 0.0, %v1103
      %v1105 = vpop.f32.mrf.mxu0
      %v1106 = vadd.f32 0.0, %v1105
      %1107 = vmatmul.bf16.gmra.mxu0 %v767
      %v1108 = vpop.f32.mrf.mxu0
      %v1109 = vadd.f32 0.0, %v1108
      %v1110 = vpop.f32.mrf.mxu0
      %v1111 = vadd.f32 0.0, %v1110
      %1112 = vmatmul.bf16.gmra.mxu0 %v769
      %v1113 = vpop.f32.mrf.mxu0
      %v1114 = vadd.f32 0.0, %v1113
      %v1115 = vpop.f32.mrf.mxu0
      %v1116 = vadd.f32 0.0, %v1115
      %1117 = vmatmul.bf16.gmra.mxu0 %v771
      %v1118 = vpop.f32.mrf.mxu0
      %v1119 = vadd.f32 0.0, %v1118
      %v1120 = vpop.f32.mrf.mxu0
      %v1121 = vadd.f32 0.0, %v1120
      %1122 = vmatmul.bf16.gmra.mxu0 %v773
      %v1123 = vpop.f32.mrf.mxu0
      %v1124 = vadd.f32 0.0, %v1123
      %v1125 = vpop.f32.mrf.mxu0
      %v1126 = vadd.f32 0.0, %v1125
      %1127 = vmatmul.bf16.gmra.mxu0 %v775
      %v1128 = vpop.f32.mrf.mxu0
      %v1129 = vadd.f32 0.0, %v1128
      %v1130 = vpop.f32.mrf.mxu0
      %v1131 = vadd.f32 0.0, %v1130
      %1132 = vmatmul.bf16.gmra.mxu0 %v777
      %v1133 = vpop.f32.mrf.mxu0
      %v1134 = vadd.f32 0.0, %v1133
      %v1135 = vpop.f32.mrf.mxu0
      %v1136 = vadd.f32 0.0, %v1135
      %1137 = vmatmul.bf16.gmra.mxu0 %v779
      %v1138 = vpop.f32.mrf.mxu0
      %v1139 = vadd.f32 0.0, %v1138
      %v1140 = vpop.f32.mrf.mxu0
      %v1141 = vadd.f32 0.0, %v1140
      %1142 = vdwg.mxu0
      %1143 = vmatpush.bf16.msra.mxu0 0
      %1144 = vmatpush.bf16.msra.mxu0 0
      %1145 = vmatpush.bf16.msra.mxu0 0
      %1146 = vmatpush.bf16.msra.mxu0 0
      %1147 = vmatpush.bf16.msra.mxu0 0
      %1148 = vmatpush.bf16.msra.mxu0 0
      %1149 = vmatpush.bf16.msra.mxu0 %v972
      %1150 = vmatpush.bf16.msra.mxu0 %v859
      %1151 = vmatmul.bf16.gmra.mxu0 %v872
      %v1152 = vpop.f32.mrf.mxu0
      %v1153 = vadd.f32 %v984, %v1152
      %v1154 = vpop.f32.mrf.mxu0
      %v1155 = vadd.f32 %v986, %v1154
      %1156 = vmatmul.bf16.gmra.mxu0 %v875
      %v1157 = vpop.f32.mrf.mxu0
      %v1158 = vadd.f32 %v989, %v1157
      %v1159 = vpop.f32.mrf.mxu0
      %v1160 = vadd.f32 %v991, %v1159
      %1161 = vmatmul.bf16.gmra.mxu0 %v878
      %v1162 = vpop.f32.mrf.mxu0
      %v1163 = vadd.f32 %v994, %v1162
      %v1164 = vpop.f32.mrf.mxu0
      %v1165 = vadd.f32 %v996, %v1164
      %1166 = vmatmul.bf16.gmra.mxu0 %v881
      %v1167 = vpop.f32.mrf.mxu0
      %v1168 = vadd.f32 %v999, %v1167
      %v1169 = vpop.f32.mrf.mxu0
      %v1170 = vadd.f32 %v1001, %v1169
      %1171 = vmatmul.bf16.gmra.mxu0 %v884
      %v1172 = vpop.f32.mrf.mxu0
      %v1173 = vadd.f32 %v1004, %v1172
      %v1174 = vpop.f32.mrf.mxu0
      %v1175 = vadd.f32 %v1006, %v1174
      %1176 = vmatmul.bf16.gmra.mxu0 %v887
      %v1177 = vpop.f32.mrf.mxu0
      %v1178 = vadd.f32 %v1009, %v1177
      %v1179 = vpop.f32.mrf.mxu0
      %v1180 = vadd.f32 %v1011, %v1179
      %1181 = vmatmul.bf16.gmra.mxu0 %v890
      %v1182 = vpop.f32.mrf.mxu0
      %v1183 = vadd.f32 %v1014, %v1182
      %v1184 = vpop.f32.mrf.mxu0
      %v1185 = vadd.f32 %v1016, %v1184
      %1186 = vmatmul.bf16.gmra.mxu0 %v893
      %v1187 = vpop.f32.mrf.mxu0
      %v1188 = vadd.f32 %v1019, %v1187
      %v1189 = vpop.f32.mrf.mxu0
      %v1190 = vadd.f32 %v1021, %v1189
      %1191 = vmatmul.bf16.gmra.mxu0 %v896
      %v1192 = vpop.f32.mrf.mxu0
      %v1193 = vadd.f32 %v1024, %v1192
      %v1194 = vpop.f32.mrf.mxu0
      %v1195 = vadd.f32 %v1026, %v1194
      %1196 = vmatmul.bf16.gmra.mxu0 %v899
      %v1197 = vpop.f32.mrf.mxu0
      %v1198 = vadd.f32 %v1029, %v1197
      %v1199 = vpop.f32.mrf.mxu0
      %v1200 = vadd.f32 %v1031, %v1199
      %1201 = vmatmul.bf16.gmra.mxu0 %v902
      %v1202 = vpop.f32.mrf.mxu0
      %v1203 = vadd.f32 %v1034, %v1202
      %v1204 = vpop.f32.mrf.mxu0
      %v1205 = vadd.f32 %v1036, %v1204
      %1206 = vmatmul.bf16.gmra.mxu0 %v905
      %v1207 = vpop.f32.mrf.mxu0
      %v1208 = vadd.f32 %v1039, %v1207
      %v1209 = vpop.f32.mrf.mxu0
      %v1210 = vadd.f32 %v1041, %v1209
      %1211 = vmatmul.bf16.gmra.mxu0 %v908
      %v1212 = vpop.f32.mrf.mxu0
      %v1213 = vadd.f32 %v1044, %v1212
      %v1214 = vpop.f32.mrf.mxu0
      %v1215 = vadd.f32 %v1046, %v1214
      %1216 = vmatmul.bf16.gmra.mxu0 %v911
      %v1217 = vpop.f32.mrf.mxu0
      %v1218 = vadd.f32 %v1049, %v1217
      %v1219 = vpop.f32.mrf.mxu0
      %v1220 = vadd.f32 %v1051, %v1219
      %1221 = vmatmul.bf16.gmra.mxu0 %v914
      %v1222 = vpop.f32.mrf.mxu0
      %v1223 = vadd.f32 %v1054, %v1222
      %v1224 = vpop.f32.mrf.mxu0
      %v1225 = vadd.f32 %v1056, %v1224
      %1226 = vmatmul.bf16.gmra.mxu0 %v917
      %v1227 = vpop.f32.mrf.mxu0
      %v1228 = vadd.f32 %v1059, %v1227
      %v1229 = vpop.f32.mrf.mxu0
      %v1230 = vadd.f32 %v1061, %v1229
      %1231 = vmatmul.bf16.gmra.mxu0 %v920
      %v1232 = vpop.f32.mrf.mxu0
      %v1233 = vadd.f32 %v1064, %v1232
      %v1234 = vpop.f32.mrf.mxu0
      %v1235 = vadd.f32 %v1066, %v1234
      %1236 = vmatmul.bf16.gmra.mxu0 %v923
      %v1237 = vpop.f32.mrf.mxu0
      %v1238 = vadd.f32 %v1069, %v1237
      %v1239 = vpop.f32.mrf.mxu0
      %v1240 = vadd.f32 %v1071, %v1239
      %1241 = vmatmul.bf16.gmra.mxu0 %v926
      %v1242 = vpop.f32.mrf.mxu0
      %v1243 = vadd.f32 %v1074, %v1242
      %v1244 = vpop.f32.mrf.mxu0
      %v1245 = vadd.f32 %v1076, %v1244
      %1246 = vmatmul.bf16.gmra.mxu0 %v929
      %v1247 = vpop.f32.mrf.mxu0
      %v1248 = vadd.f32 %v1079, %v1247
      %v1249 = vpop.f32.mrf.mxu0
      %v1250 = vadd.f32 %v1081, %v1249
      %1251 = vmatmul.bf16.gmra.mxu0 %v932
      %v1252 = vpop.f32.mrf.mxu0
      %v1253 = vadd.f32 %v1084, %v1252
      %v1254 = vpop.f32.mrf.mxu0
      %v1255 = vadd.f32 %v1086, %v1254
      %1256 = vmatmul.bf16.gmra.mxu0 %v935
      %v1257 = vpop.f32.mrf.mxu0
      %v1258 = vadd.f32 %v1089, %v1257
      %v1259 = vpop.f32.mrf.mxu0
      %v1260 = vadd.f32 %v1091, %v1259
      %1261 = vmatmul.bf16.gmra.mxu0 %v938
      %v1262 = vpop.f32.mrf.mxu0
      %v1263 = vadd.f32 %v1094, %v1262
      %v1264 = vpop.f32.mrf.mxu0
      %v1265 = vadd.f32 %v1096, %v1264
      %1266 = vmatmul.bf16.gmra.mxu0 %v941
      %v1267 = vpop.f32.mrf.mxu0
      %v1268 = vadd.f32 %v1099, %v1267
      %v1269 = vpop.f32.mrf.mxu0
      %v1270 = vadd.f32 %v1101, %v1269
      %1271 = vmatmul.bf16.gmra.mxu0 %v944
      %v1272 = vpop.f32.mrf.mxu0
      %v1273 = vadd.f32 %v1104, %v1272
      %v1274 = vpop.f32.mrf.mxu0
      %v1275 = vadd.f32 %v1106, %v1274
      %1276 = vmatmul.bf16.gmra.mxu0 %v947
      %v1277 = vpop.f32.mrf.mxu0
      %v1278 = vadd.f32 %v1109, %v1277
      %v1279 = vpop.f32.mrf.mxu0
      %v1280 = vadd.f32 %v1111, %v1279
      %1281 = vmatmul.bf16.gmra.mxu0 %v950
      %v1282 = vpop.f32.mrf.mxu0
      %v1283 = vadd.f32 %v1114, %v1282
      %v1284 = vpop.f32.mrf.mxu0
      %v1285 = vadd.f32 %v1116, %v1284
      %1286 = vmatmul.bf16.gmra.mxu0 %v953
      %v1287 = vpop.f32.mrf.mxu0
      %v1288 = vadd.f32 %v1119, %v1287
      %v1289 = vpop.f32.mrf.mxu0
      %v1290 = vadd.f32 %v1121, %v1289
      %1291 = vmatmul.bf16.gmra.mxu0 %v956
      %v1292 = vpop.f32.mrf.mxu0
      %v1293 = vadd.f32 %v1124, %v1292
      %v1294 = vpop.f32.mrf.mxu0
      %v1295 = vadd.f32 %v1126, %v1294
      %1296 = vmatmul.bf16.gmra.mxu0 %v959
      %v1297 = vpop.f32.mrf.mxu0
      %v1298 = vadd.f32 %v1129, %v1297
      %v1299 = vpop.f32.mrf.mxu0
      %v1300 = vadd.f32 %v1131, %v1299
      %1301 = vmatmul.bf16.gmra.mxu0 %v962
      %v1302 = vpop.f32.mrf.mxu0
      %v1303 = vadd.f32 %v1134, %v1302
      %v1304 = vpop.f32.mrf.mxu0
      %v1305 = vadd.f32 %v1136, %v1304
      %1306 = vmatmul.bf16.gmra.mxu0 %v965
      %v1307 = vpop.f32.mrf.mxu0
      %v1308 = vadd.f32 %v1139, %v1307
      %v1309 = vpop.f32.mrf.mxu0
      %v1310 = vadd.f32 %v1141, %v1309
      %1311 = vdwg.mxu0
      %v1312 = vadd.f32 %v378, %v1153
      %v1313 = vadd.f32 %v379, %v1155
      %v1314 = vadd.f32 %v380, %v1158
      %v1315 = vadd.f32 %v381, %v1160
      %v1316 = vadd.f32 %v382, %v1163
      %v1317 = vadd.f32 %v383, %v1165
      %v1318 = vadd.f32 %v384, %v1168
      %v1319 = vadd.f32 %v385, %v1170
      %v1320 = vadd.f32 %v386, %v1173
      %v1321 = vadd.f32 %v387, %v1175
      %v1322 = vadd.f32 %v388, %v1178
      %v1323 = vadd.f32 %v389, %v1180
      %v1324 = vadd.f32 %v390, %v1183
      %v1325 = vadd.f32 %v391, %v1185
      %v1326 = vadd.f32 %v392, %v1188
      %v1327 = vadd.f32 %v393, %v1190
      %v1328 = vadd.f32 %v394, %v1193
      %v1329 = vadd.f32 %v395, %v1195
      %v1330 = vadd.f32 %v396, %v1198
      %v1331 = vadd.f32 %v397, %v1200
      %v1332 = vadd.f32 %v398, %v1203
      %v1333 = vadd.f32 %v399, %v1205
      %v1334 = vadd.f32 %v400, %v1208
      %v1335 = vadd.f32 %v401, %v1210
      %v1336 = vadd.f32 %v402, %v1213
      %v1337 = vadd.f32 %v403, %v1215
      %v1338 = vadd.f32 %v404, %v1218
      %v1339 = vadd.f32 %v405, %v1220
      %v1340 = vadd.f32 %v406, %v1223
      %v1341 = vadd.f32 %v407, %v1225
      %v1342 = vadd.f32 %v408, %v1228
      %v1343 = vadd.f32 %v409, %v1230
      %v1344 = vadd.f32 %v410, %v1233
      %v1345 = vadd.f32 %v411, %v1235
      %v1346 = vadd.f32 %v412, %v1238
      %v1347 = vadd.f32 %v413, %v1240
      %v1348 = vadd.f32 %v414, %v1243
      %v1349 = vadd.f32 %v415, %v1245
      %v1350 = vadd.f32 %v416, %v1248
      %v1351 = vadd.f32 %v417, %v1250
      %v1352 = vadd.f32 %v418, %v1253
      %v1353 = vadd.f32 %v419, %v1255
      %v1354 = vadd.f32 %v420, %v1258
      %v1355 = vadd.f32 %v421, %v1260
      %v1356 = vadd.f32 %v422, %v1263
      %v1357 = vadd.f32 %v423, %v1265
      %v1358 = vadd.f32 %v424, %v1268
      %v1359 = vadd.f32 %v425, %v1270
      %v1360 = vadd.f32 %v426, %v1273
      %v1361 = vadd.f32 %v427, %v1275
      %v1362 = vadd.f32 %v428, %v1278
      %v1363 = vadd.f32 %v429, %v1280
      %v1364 = vadd.f32 %v430, %v1283
      %v1365 = vadd.f32 %v431, %v1285
      %v1366 = vadd.f32 %v432, %v1288
      %v1367 = vadd.f32 %v433, %v1290
      %v1368 = vadd.f32 %v434, %v1293
      %v1369 = vadd.f32 %v435, %v1295
      %v1370 = vadd.f32 %v436, %v1298
      %v1371 = vadd.f32 %v437, %v1300
      %v1372 = vadd.f32 %v438, %v1303
      %v1373 = vadd.f32 %v439, %v1305
      %v1374 = vadd.f32 %v440, %v1308
      %v1375 = vadd.f32 %v441, %v1310
      %vm1376 = vcmask 523264
      %1377 = vst.msk [vmem:[#allocation2] sm:$0xff] %vm1376, %v1312
      %1378 = vst.msk [vmem:[#allocation2 + $0x8] sm:$0xff] %vm1376, %v1313
      %1379 = vst.msk [vmem:[#allocation2 + $0x10] sm:$0xff] %vm1376, %v1314
      %1380 = vst.msk [vmem:[#allocation2 + $0x18] sm:$0xff] %vm1376, %v1315
      %1381 = vst.msk [vmem:[#allocation2 + $0x20] sm:$0xff] %vm1376, %v1316
      %1382 = vst.msk [vmem:[#allocation2 + $0x28] sm:$0xff] %vm1376, %v1317
      %1383 = vst.msk [vmem:[#allocation2 + $0x30] sm:$0xff] %vm1376, %v1318
      %1384 = vst.msk [vmem:[#allocation2 + $0x38] sm:$0xff] %vm1376, %v1319
      %1385 = vst.msk [vmem:[#allocation2 + $0x40] sm:$0xff] %vm1376, %v1320
      %1386 = vst.msk [vmem:[#allocation2 + $0x48] sm:$0xff] %vm1376, %v1321
      %1387 = vst.msk [vmem:[#allocation2 + $0x50] sm:$0xff] %vm1376, %v1322
      %1388 = vst.msk [vmem:[#allocation2 + $0x58] sm:$0xff] %vm1376, %v1323
      %1389 = vst.msk [vmem:[#allocation2 + $0x60] sm:$0xff] %vm1376, %v1324
      %1390 = vst.msk [vmem:[#allocation2 + $0x68] sm:$0xff] %vm1376, %v1325
      %1391 = vst.msk [vmem:[#allocation2 + $0x70] sm:$0xff] %vm1376, %v1326
      %1392 = vst.msk [vmem:[#allocation2 + $0x78] sm:$0xff] %vm1376, %v1327
      %1393 = vst.msk [vmem:[#allocation2 + $0x80] sm:$0xff] %vm1376, %v1328
      %1394 = vst.msk [vmem:[#allocation2 + $0x88] sm:$0xff] %vm1376, %v1329
      %1395 = vst.msk [vmem:[#allocation2 + $0x90] sm:$0xff] %vm1376, %v1330
      %1396 = vst.msk [vmem:[#allocation2 + $0x98] sm:$0xff] %vm1376, %v1331
      %1397 = vst.msk [vmem:[#allocation2 + $0xa0] sm:$0xff] %vm1376, %v1332
      %1398 = vst.msk [vmem:[#allocation2 + $0xa8] sm:$0xff] %vm1376, %v1333
      %1399 = vst.msk [vmem:[#allocation2 + $0xb0] sm:$0xff] %vm1376, %v1334
      %1400 = vst.msk [vmem:[#allocation2 + $0xb8] sm:$0xff] %vm1376, %v1335
      %1401 = vst.msk [vmem:[#allocation2 + $0xc0] sm:$0xff] %vm1376, %v1336
      %1402 = vst.msk [vmem:[#allocation2 + $0xc8] sm:$0xff] %vm1376, %v1337
      %1403 = vst.msk [vmem:[#allocation2 + $0xd0] sm:$0xff] %vm1376, %v1338
      %1404 = vst.msk [vmem:[#allocation2 + $0xd8] sm:$0xff] %vm1376, %v1339
      %1405 = vst.msk [vmem:[#allocation2 + $0xe0] sm:$0xff] %vm1376, %v1340
      %1406 = vst.msk [vmem:[#allocation2 + $0xe8] sm:$0xff] %vm1376, %v1341
      %1407 = vst.msk [vmem:[#allocation2 + $0xf0] sm:$0xff] %vm1376, %v1342
      %1408 = vst.msk [vmem:[#allocation2 + $0xf8] sm:$0xff] %vm1376, %v1343
      %1409 = vst.msk [vmem:[#allocation2 + $0x100] sm:$0xff] %vm1376, %v1344
      %1410 = vst.msk [vmem:[#allocation2 + $0x108] sm:$0xff] %vm1376, %v1345
      %1411 = vst.msk [vmem:[#allocation2 + $0x110] sm:$0xff] %vm1376, %v1346
      %1412 = vst.msk [vmem:[#allocation2 + $0x118] sm:$0xff] %vm1376, %v1347
      %1413 = vst.msk [vmem:[#allocation2 + $0x120] sm:$0xff] %vm1376, %v1348
      %1414 = vst.msk [vmem:[#allocation2 + $0x128] sm:$0xff] %vm1376, %v1349
      %1415 = vst.msk [vmem:[#allocation2 + $0x130] sm:$0xff] %vm1376, %v1350
      %1416 = vst.msk [vmem:[#allocation2 + $0x138] sm:$0xff] %vm1376, %v1351
      %1417 = vst.msk [vmem:[#allocation2 + $0x140] sm:$0xff] %vm1376, %v1352
      %1418 = vst.msk [vmem:[#allocation2 + $0x148] sm:$0xff] %vm1376, %v1353
      %1419 = vst.msk [vmem:[#allocation2 + $0x150] sm:$0xff] %vm1376, %v1354
      %1420 = vst.msk [vmem:[#allocation2 + $0x158] sm:$0xff] %vm1376, %v1355
      %1421 = vst.msk [vmem:[#allocation2 + $0x160] sm:$0xff] %vm1376, %v1356
      %1422 = vst.msk [vmem:[#allocation2 + $0x168] sm:$0xff] %vm1376, %v1357
      %1423 = vst.msk [vmem:[#allocation2 + $0x170] sm:$0xff] %vm1376, %v1358
      %1424 = vst.msk [vmem:[#allocation2 + $0x178] sm:$0xff] %vm1376, %v1359
      %1425 = vst.msk [vmem:[#allocation2 + $0x180] sm:$0xff] %vm1376, %v1360
      %1426 = vst.msk [vmem:[#allocation2 + $0x188] sm:$0xff] %vm1376, %v1361
      %1427 = vst.msk [vmem:[#allocation2 + $0x190] sm:$0xff] %vm1376, %v1362
      %1428 = vst.msk [vmem:[#allocation2 + $0x198] sm:$0xff] %vm1376, %v1363
      %1429 = vst.msk [vmem:[#allocation2 + $0x1a0] sm:$0xff] %vm1376, %v1364
      %1430 = vst.msk [vmem:[#allocation2 + $0x1a8] sm:$0xff] %vm1376, %v1365
      %1431 = vst.msk [vmem:[#allocation2 + $0x1b0] sm:$0xff] %vm1376, %v1366
      %1432 = vst.msk [vmem:[#allocation2 + $0x1b8] sm:$0xff] %vm1376, %v1367
      %1433 = vst.msk [vmem:[#allocation2 + $0x1c0] sm:$0xff] %vm1376, %v1368
      %1434 = vst.msk [vmem:[#allocation2 + $0x1c8] sm:$0xff] %vm1376, %v1369
      %1435 = vst.msk [vmem:[#allocation2 + $0x1d0] sm:$0xff] %vm1376, %v1370
      %1436 = vst.msk [vmem:[#allocation2 + $0x1d8] sm:$0xff] %vm1376, %v1371
      %1437 = vst.msk [vmem:[#allocation2 + $0x1e0] sm:$0xff] %vm1376, %v1372
      %1438 = vst.msk [vmem:[#allocation2 + $0x1e8] sm:$0xff] %vm1376, %v1373
      %1439 = vst.msk [vmem:[#allocation2 + $0x1f0] sm:$0xff] %vm1376, %v1374
      %1440 = vst.msk [vmem:[#allocation2 + $0x1f8] sm:$0xff] %vm1376, %v1375
      // Predicated region
      $region41: #{matmul_affine.1} parent=35 // pred_check
        %p1441 = pneg %p309
      $region42: #{matmul_affine.1} parent=35 // pred_check_branch
        %1443 = sbr.rel (%p1441) target = $region44
      $region43: #{matmul_affine.1} parent=35 // pred_region
        %v1444 = vld [vmem:[#allocation2] sm:$0xff]
        %v1445 = vld [vmem:[#allocation2 + $0x8] sm:$0xff]
        %v1446 = vld [vmem:[#allocation2 + $0x10] sm:$0xff]
        %v1447 = vld [vmem:[#allocation2 + $0x18] sm:$0xff]
        %v1448 = vld [vmem:[#allocation2 + $0x20] sm:$0xff]
        %v1449 = vld [vmem:[#allocation2 + $0x28] sm:$0xff]
        %v1450 = vld [vmem:[#allocation2 + $0x30] sm:$0xff]
        %v1451 = vld [vmem:[#allocation2 + $0x38] sm:$0xff]
        %v1452 = vld [vmem:[#allocation2 + $0x40] sm:$0xff]
        %v1453 = vld [vmem:[#allocation2 + $0x48] sm:$0xff]
        %v1454 = vld [vmem:[#allocation2 + $0x50] sm:$0xff]
        %v1455 = vld [vmem:[#allocation2 + $0x58] sm:$0xff]
        %v1456 = vld [vmem:[#allocation2 + $0x60] sm:$0xff]
        %v1457 = vld [vmem:[#allocation2 + $0x68] sm:$0xff]
        %v1458 = vld [vmem:[#allocation2 + $0x70] sm:$0xff]
        %v1459 = vld [vmem:[#allocation2 + $0x78] sm:$0xff]
        %v1460 = vld [vmem:[#allocation2 + $0x80] sm:$0xff]
        %v1461 = vld [vmem:[#allocation2 + $0x88] sm:$0xff]
        %v1462 = vld [vmem:[#allocation2 + $0x90] sm:$0xff]
        %v1463 = vld [vmem:[#allocation2 + $0x98] sm:$0xff]
        %v1464 = vld [vmem:[#allocation2 + $0xa0] sm:$0xff]
        %v1465 = vld [vmem:[#allocation2 + $0xa8] sm:$0xff]
        %v1466 = vld [vmem:[#allocation2 + $0xb0] sm:$0xff]
        %v1467 = vld [vmem:[#allocation2 + $0xb8] sm:$0xff]
        %v1468 = vld [vmem:[#allocation2 + $0xc0] sm:$0xff]
        %v1469 = vld [vmem:[#allocation2 + $0xc8] sm:$0xff]
        %v1470 = vld [vmem:[#allocation2 + $0xd0] sm:$0xff]
        %v1471 = vld [vmem:[#allocation2 + $0xd8] sm:$0xff]
        %v1472 = vld [vmem:[#allocation2 + $0xe0] sm:$0xff]
        %v1473 = vld [vmem:[#allocation2 + $0xe8] sm:$0xff]
        %v1474 = vld [vmem:[#allocation2 + $0xf0] sm:$0xff]
        %v1475 = vld [vmem:[#allocation2 + $0xf8] sm:$0xff]
        %v1476 = vld [vmem:[#allocation2 + $0x100] sm:$0xff]
        %v1477 = vld [vmem:[#allocation2 + $0x108] sm:$0xff]
        %v1478 = vld [vmem:[#allocation2 + $0x110] sm:$0xff]
        %v1479 = vld [vmem:[#allocation2 + $0x118] sm:$0xff]
        %v1480 = vld [vmem:[#allocation2 + $0x120] sm:$0xff]
        %v1481 = vld [vmem:[#allocation2 + $0x128] sm:$0xff]
        %v1482 = vld [vmem:[#allocation2 + $0x130] sm:$0xff]
        %v1483 = vld [vmem:[#allocation2 + $0x138] sm:$0xff]
        %v1484 = vld [vmem:[#allocation2 + $0x140] sm:$0xff]
        %v1485 = vld [vmem:[#allocation2 + $0x148] sm:$0xff]
        %v1486 = vld [vmem:[#allocation2 + $0x150] sm:$0xff]
        %v1487 = vld [vmem:[#allocation2 + $0x158] sm:$0xff]
        %v1488 = vld [vmem:[#allocation2 + $0x160] sm:$0xff]
        %v1489 = vld [vmem:[#allocation2 + $0x168] sm:$0xff]
        %v1490 = vld [vmem:[#allocation2 + $0x170] sm:$0xff]
        %v1491 = vld [vmem:[#allocation2 + $0x178] sm:$0xff]
        %v1492 = vld [vmem:[#allocation2 + $0x180] sm:$0xff]
        %v1493 = vld [vmem:[#allocation2 + $0x188] sm:$0xff]
        %v1494 = vld [vmem:[#allocation2 + $0x190] sm:$0xff]
        %v1495 = vld [vmem:[#allocation2 + $0x198] sm:$0xff]
        %v1496 = vld [vmem:[#allocation2 + $0x1a0] sm:$0xff]
        %v1497 = vld [vmem:[#allocation2 + $0x1a8] sm:$0xff]
        %v1498 = vld [vmem:[#allocation2 + $0x1b0] sm:$0xff]
        %v1499 = vld [vmem:[#allocation2 + $0x1b8] sm:$0xff]
        %v1500 = vld [vmem:[#allocation2 + $0x1c0] sm:$0xff]
        %v1501 = vld [vmem:[#allocation2 + $0x1c8] sm:$0xff]
        %v1502 = vld [vmem:[#allocation2 + $0x1d0] sm:$0xff]
        %v1503 = vld [vmem:[#allocation2 + $0x1d8] sm:$0xff]
        %v1504 = vld [vmem:[#allocation2 + $0x1e0] sm:$0xff]
        %v1505 = vld [vmem:[#allocation2 + $0x1e8] sm:$0xff]
        %v1506 = vld [vmem:[#allocation2 + $0x1f0] sm:$0xff]
        %v1507 = vld [vmem:[#allocation2 + $0x1f8] sm:$0xff]
        %v1508 = vld [vmem:[%s295] sm:$0x1]
        %v1510 = vperm.slane %v1508, 0
        %v1512 = vmul.f32 %v1444, %v1510
        %v1513 = vmul.f32 %v1445, %v1510
        %v1514 = vmul.f32 %v1446, %v1510
        %v1515 = vmul.f32 %v1447, %v1510
        %v1516 = vmul.f32 %v1448, %v1510
        %v1517 = vmul.f32 %v1449, %v1510
        %v1518 = vmul.f32 %v1450, %v1510
        %v1519 = vmul.f32 %v1451, %v1510
        %v1520 = vmul.f32 %v1452, %v1510
        %v1521 = vmul.f32 %v1453, %v1510
        %v1522 = vmul.f32 %v1454, %v1510
        %v1523 = vmul.f32 %v1455, %v1510
        %v1524 = vmul.f32 %v1456, %v1510
        %v1525 = vmul.f32 %v1457, %v1510
        %v1526 = vmul.f32 %v1458, %v1510
        %v1527 = vmul.f32 %v1459, %v1510
        %v1528 = vmul.f32 %v1460, %v1510
        %v1529 = vmul.f32 %v1461, %v1510
        %v1530 = vmul.f32 %v1462, %v1510
        %v1531 = vmul.f32 %v1463, %v1510
        %v1532 = vmul.f32 %v1464, %v1510
        %v1533 = vmul.f32 %v1465, %v1510
        %v1534 = vmul.f32 %v1466, %v1510
        %v1535 = vmul.f32 %v1467, %v1510
        %v1536 = vmul.f32 %v1468, %v1510
        %v1537 = vmul.f32 %v1469, %v1510
        %v1538 = vmul.f32 %v1470, %v1510
        %v1539 = vmul.f32 %v1471, %v1510
        %v1540 = vmul.f32 %v1472, %v1510
        %v1541 = vmul.f32 %v1473, %v1510
        %v1542 = vmul.f32 %v1474, %v1510
        %v1543 = vmul.f32 %v1475, %v1510
        %v1544 = vmul.f32 %v1476, %v1510
        %v1545 = vmul.f32 %v1477, %v1510
        %v1546 = vmul.f32 %v1478, %v1510
        %v1547 = vmul.f32 %v1479, %v1510
        %v1548 = vmul.f32 %v1480, %v1510
        %v1549 = vmul.f32 %v1481, %v1510
        %v1550 = vmul.f32 %v1482, %v1510
        %v1551 = vmul.f32 %v1483, %v1510
        %v1552 = vmul.f32 %v1484, %v1510
        %v1553 = vmul.f32 %v1485, %v1510
        %v1554 = vmul.f32 %v1486, %v1510
        %v1555 = vmul.f32 %v1487, %v1510
        %v1556 = vmul.f32 %v1488, %v1510
        %v1557 = vmul.f32 %v1489, %v1510
        %v1558 = vmul.f32 %v1490, %v1510
        %v1559 = vmul.f32 %v1491, %v1510
        %v1560 = vmul.f32 %v1492, %v1510
        %v1561 = vmul.f32 %v1493, %v1510
        %v1562 = vmul.f32 %v1494, %v1510
        %v1563 = vmul.f32 %v1495, %v1510
        %v1564 = vmul.f32 %v1496, %v1510
        %v1565 = vmul.f32 %v1497, %v1510
        %v1566 = vmul.f32 %v1498, %v1510
        %v1567 = vmul.f32 %v1499, %v1510
        %v1568 = vmul.f32 %v1500, %v1510
        %v1569 = vmul.f32 %v1501, %v1510
        %v1570 = vmul.f32 %v1502, %v1510
        %v1571 = vmul.f32 %v1503, %v1510
        %v1572 = vmul.f32 %v1504, %v1510
        %v1573 = vmul.f32 %v1505, %v1510
        %v1574 = vmul.f32 %v1506, %v1510
        %v1575 = vmul.f32 %v1507, %v1510
        %v1576 = vld [vmem:[%s298] sm:$0x1]
        %v1578 = vperm.slane %v1576, 0
        %v1580 = vadd.f32 %v1512, %v1578
        %v1581 = vadd.f32 %v1513, %v1578
        %v1582 = vadd.f32 %v1514, %v1578
        %v1583 = vadd.f32 %v1515, %v1578
        %v1584 = vadd.f32 %v1516, %v1578
        %v1585 = vadd.f32 %v1517, %v1578
        %v1586 = vadd.f32 %v1518, %v1578
        %v1587 = vadd.f32 %v1519, %v1578
        %v1588 = vadd.f32 %v1520, %v1578
        %v1589 = vadd.f32 %v1521, %v1578
        %v1590 = vadd.f32 %v1522, %v1578
        %v1591 = vadd.f32 %v1523, %v1578
        %v1592 = vadd.f32 %v1524, %v1578
        %v1593 = vadd.f32 %v1525, %v1578
        %v1594 = vadd.f32 %v1526, %v1578
        %v1595 = vadd.f32 %v1527, %v1578
        %v1596 = vadd.f32 %v1528, %v1578
        %v1597 = vadd.f32 %v1529, %v1578
        %v1598 = vadd.f32 %v1530, %v1578
        %v1599 = vadd.f32 %v1531, %v1578
        %v1600 = vadd.f32 %v1532, %v1578
        %v1601 = vadd.f32 %v1533, %v1578
        %v1602 = vadd.f32 %v1534, %v1578
        %v1603 = vadd.f32 %v1535, %v1578
        %v1604 = vadd.f32 %v1536, %v1578
        %v1605 = vadd.f32 %v1537, %v1578
        %v1606 = vadd.f32 %v1538, %v1578
        %v1607 = vadd.f32 %v1539, %v1578
        %v1608 = vadd.f32 %v1540, %v1578
        %v1609 = vadd.f32 %v1541, %v1578
        %v1610 = vadd.f32 %v1542, %v1578
        %v1611 = vadd.f32 %v1543, %v1578
        %v1612 = vadd.f32 %v1544, %v1578
        %v1613 = vadd.f32 %v1545, %v1578
        %v1614 = vadd.f32 %v1546, %v1578
        %v1615 = vadd.f32 %v1547, %v1578
        %v1616 = vadd.f32 %v1548, %v1578
        %v1617 = vadd.f32 %v1549, %v1578
        %v1618 = vadd.f32 %v1550, %v1578
        %v1619 = vadd.f32 %v1551, %v1578
        %v1620 = vadd.f32 %v1552, %v1578
        %v1621 = vadd.f32 %v1553, %v1578
        %v1622 = vadd.f32 %v1554, %v1578
        %v1623 = vadd.f32 %v1555, %v1578
        %v1624 = vadd.f32 %v1556, %v1578
        %v1625 = vadd.f32 %v1557, %v1578
        %v1626 = vadd.f32 %v1558, %v1578
        %v1627 = vadd.f32 %v1559, %v1578
        %v1628 = vadd.f32 %v1560, %v1578
        %v1629 = vadd.f32 %v1561, %v1578
        %v1630 = vadd.f32 %v1562, %v1578
        %v1631 = vadd.f32 %v1563, %v1578
        %v1632 = vadd.f32 %v1564, %v1578
        %v1633 = vadd.f32 %v1565, %v1578
        %v1634 = vadd.f32 %v1566, %v1578
        %v1635 = vadd.f32 %v1567, %v1578
        %v1636 = vadd.f32 %v1568, %v1578
        %v1637 = vadd.f32 %v1569, %v1578
        %v1638 = vadd.f32 %v1570, %v1578
        %v1639 = vadd.f32 %v1571, %v1578
        %v1640 = vadd.f32 %v1572, %v1578
        %v1641 = vadd.f32 %v1573, %v1578
        %v1642 = vadd.f32 %v1574, %v1578
        %v1643 = vadd.f32 %v1575, %v1578
        %v1644 = vmax.f32 %v1580, 0.0
        %v1645 = vmax.f32 %v1581, 0.0
        %v1646 = vmax.f32 %v1582, 0.0
        %v1647 = vmax.f32 %v1583, 0.0
        %v1648 = vmax.f32 %v1584, 0.0
        %v1649 = vmax.f32 %v1585, 0.0
        %v1650 = vmax.f32 %v1586, 0.0
        %v1651 = vmax.f32 %v1587, 0.0
        %v1652 = vmax.f32 %v1588, 0.0
        %v1653 = vmax.f32 %v1589, 0.0
        %v1654 = vmax.f32 %v1590, 0.0
        %v1655 = vmax.f32 %v1591, 0.0
        %v1656 = vmax.f32 %v1592, 0.0
        %v1657 = vmax.f32 %v1593, 0.0
        %v1658 = vmax.f32 %v1594, 0.0
        %v1659 = vmax.f32 %v1595, 0.0
        %v1660 = vmax.f32 %v1596, 0.0
        %v1661 = vmax.f32 %v1597, 0.0
        %v1662 = vmax.f32 %v1598, 0.0
        %v1663 = vmax.f32 %v1599, 0.0
        %v1664 = vmax.f32 %v1600, 0.0
        %v1665 = vmax.f32 %v1601, 0.0
        %v1666 = vmax.f32 %v1602, 0.0
        %v1667 = vmax.f32 %v1603, 0.0
        %v1668 = vmax.f32 %v1604, 0.0
        %v1669 = vmax.f32 %v1605, 0.0
        %v1670 = vmax.f32 %v1606, 0.0
        %v1671 = vmax.f32 %v1607, 0.0
        %v1672 = vmax.f32 %v1608, 0.0
        %v1673 = vmax.f32 %v1609, 0.0
        %v1674 = vmax.f32 %v1610, 0.0
        %v1675 = vmax.f32 %v1611, 0.0
        %v1676 = vmax.f32 %v1612, 0.0
        %v1677 = vmax.f32 %v1613, 0.0
        %v1678 = vmax.f32 %v1614, 0.0
        %v1679 = vmax.f32 %v1615, 0.0
        %v1680 = vmax.f32 %v1616, 0.0
        %v1681 = vmax.f32 %v1617, 0.0
        %v1682 = vmax.f32 %v1618, 0.0
        %v1683 = vmax.f32 %v1619, 0.0
        %v1684 = vmax.f32 %v1620, 0.0
        %v1685 = vmax.f32 %v1621, 0.0
        %v1686 = vmax.f32 %v1622, 0.0
        %v1687 = vmax.f32 %v1623, 0.0
        %v1688 = vmax.f32 %v1624, 0.0
        %v1689 = vmax.f32 %v1625, 0.0
        %v1690 = vmax.f32 %v1626, 0.0
        %v1691 = vmax.f32 %v1627, 0.0
        %v1692 = vmax.f32 %v1628, 0.0
        %v1693 = vmax.f32 %v1629, 0.0
        %v1694 = vmax.f32 %v1630, 0.0
        %v1695 = vmax.f32 %v1631, 0.0
        %v1696 = vmax.f32 %v1632, 0.0
        %v1697 = vmax.f32 %v1633, 0.0
        %v1698 = vmax.f32 %v1634, 0.0
        %v1699 = vmax.f32 %v1635, 0.0
        %v1700 = vmax.f32 %v1636, 0.0
        %v1701 = vmax.f32 %v1637, 0.0
        %v1702 = vmax.f32 %v1638, 0.0
        %v1703 = vmax.f32 %v1639, 0.0
        %v1704 = vmax.f32 %v1640, 0.0
        %v1705 = vmax.f32 %v1641, 0.0
        %v1706 = vmax.f32 %v1642, 0.0
        %v1707 = vmax.f32 %v1643, 0.0
        %v1708 = vpack.c.bf16 %v1644, %v1644
        %v1709 = vpack.c.bf16 %v1645, %v1645
        %v1710 = vpack.c.bf16 %v1646, %v1646
        %v1711 = vpack.c.bf16 %v1647, %v1647
        %v1712 = vpack.c.bf16 %v1648, %v1648
        %v1713 = vpack.c.bf16 %v1649, %v1649
        %v1714 = vpack.c.bf16 %v1650, %v1650
        %v1715 = vpack.c.bf16 %v1651, %v1651
        %v1716 = vpack.c.bf16 %v1652, %v1652
        %v1717 = vpack.c.bf16 %v1653, %v1653
        %v1718 = vpack.c.bf16 %v1654, %v1654
        %v1719 = vpack.c.bf16 %v1655, %v1655
        %v1720 = vpack.c.bf16 %v1656, %v1656
        %v1721 = vpack.c.bf16 %v1657, %v1657
        %v1722 = vpack.c.bf16 %v1658, %v1658
        %v1723 = vpack.c.bf16 %v1659, %v1659
        %v1724 = vpack.c.bf16 %v1660, %v1660
        %v1725 = vpack.c.bf16 %v1661, %v1661
        %v1726 = vpack.c.bf16 %v1662, %v1662
        %v1727 = vpack.c.bf16 %v1663, %v1663
        %v1728 = vpack.c.bf16 %v1664, %v1664
        %v1729 = vpack.c.bf16 %v1665, %v1665
        %v1730 = vpack.c.bf16 %v1666, %v1666
        %v1731 = vpack.c.bf16 %v1667, %v1667
        %v1732 = vpack.c.bf16 %v1668, %v1668
        %v1733 = vpack.c.bf16 %v1669, %v1669
        %v1734 = vpack.c.bf16 %v1670, %v1670
        %v1735 = vpack.c.bf16 %v1671, %v1671
        %v1736 = vpack.c.bf16 %v1672, %v1672
        %v1737 = vpack.c.bf16 %v1673, %v1673
        %v1738 = vpack.c.bf16 %v1674, %v1674
        %v1739 = vpack.c.bf16 %v1675, %v1675
        %v1740 = vpack.c.bf16 %v1676, %v1676
        %v1741 = vpack.c.bf16 %v1677, %v1677
        %v1742 = vpack.c.bf16 %v1678, %v1678
        %v1743 = vpack.c.bf16 %v1679, %v1679
        %v1744 = vpack.c.bf16 %v1680, %v1680
        %v1745 = vpack.c.bf16 %v1681, %v1681
        %v1746 = vpack.c.bf16 %v1682, %v1682
        %v1747 = vpack.c.bf16 %v1683, %v1683
        %v1748 = vpack.c.bf16 %v1684, %v1684
        %v1749 = vpack.c.bf16 %v1685, %v1685
        %v1750 = vpack.c.bf16 %v1686, %v1686
        %v1751 = vpack.c.bf16 %v1687, %v1687
        %v1752 = vpack.c.bf16 %v1688, %v1688
        %v1753 = vpack.c.bf16 %v1689, %v1689
        %v1754 = vpack.c.bf16 %v1690, %v1690
        %v1755 = vpack.c.bf16 %v1691, %v1691
        %v1756 = vpack.c.bf16 %v1692, %v1692
        %v1757 = vpack.c.bf16 %v1693, %v1693
        %v1758 = vpack.c.bf16 %v1694, %v1694
        %v1759 = vpack.c.bf16 %v1695, %v1695
        %v1760 = vpack.c.bf16 %v1696, %v1696
        %v1761 = vpack.c.bf16 %v1697, %v1697
        %v1762 = vpack.c.bf16 %v1698, %v1698
        %v1763 = vpack.c.bf16 %v1699, %v1699
        %v1764 = vpack.c.bf16 %v1700, %v1700
        %v1765 = vpack.c.bf16 %v1701, %v1701
        %v1766 = vpack.c.bf16 %v1702, %v1702
        %v1767 = vpack.c.bf16 %v1703, %v1703
        %v1768 = vpack.c.bf16 %v1704, %v1704
        %v1769 = vpack.c.bf16 %v1705, %v1705
        %v1770 = vpack.c.bf16 %v1706, %v1706
        %v1771 = vpack.c.bf16 %v1707, %v1707
        %vm1772 = vcmask 519168
        %1773 = vst.msk [vmem:[%s306] sm:$0xf] %vm1772, %v1708
        %1774 = vst.msk [vmem:[%s306 + $0x4] sm:$0xf] %vm1772, %v1709
        %1775 = vst.msk [vmem:[%s306 + $0x8] sm:$0xf] %vm1772, %v1710
        %1776 = vst.msk [vmem:[%s306 + $0xc] sm:$0xf] %vm1772, %v1711
        %1777 = vst.msk [vmem:[%s306 + $0x10] sm:$0xf] %vm1772, %v1712
        %1778 = vst.msk [vmem:[%s306 + $0x14] sm:$0xf] %vm1772, %v1713
        %1779 = vst.msk [vmem:[%s306 + $0x18] sm:$0xf] %vm1772, %v1714
        %1780 = vst.msk [vmem:[%s306 + $0x1c] sm:$0xf] %vm1772, %v1715
        %1781 = vst.msk [vmem:[%s306 + $0x20] sm:$0xf] %vm1772, %v1716
        %1782 = vst.msk [vmem:[%s306 + $0x24] sm:$0xf] %vm1772, %v1717
        %1783 = vst.msk [vmem:[%s306 + $0x28] sm:$0xf] %vm1772, %v1718
        %1784 = vst.msk [vmem:[%s306 + $0x2c] sm:$0xf] %vm1772, %v1719
        %1785 = vst.msk [vmem:[%s306 + $0x30] sm:$0xf] %vm1772, %v1720
        %1786 = vst.msk [vmem:[%s306 + $0x34] sm:$0xf] %vm1772, %v1721
        %1787 = vst.msk [vmem:[%s306 + $0x38] sm:$0xf] %vm1772, %v1722
        %1788 = vst.msk [vmem:[%s306 + $0x3c] sm:$0xf] %vm1772, %v1723
        %1789 = vst.msk [vmem:[%s306 + $0x40] sm:$0xf] %vm1772, %v1724
        %1790 = vst.msk [vmem:[%s306 + $0x44] sm:$0xf] %vm1772, %v1725
        %1791 = vst.msk [vmem:[%s306 + $0x48] sm:$0xf] %vm1772, %v1726
        %1792 = vst.msk [vmem:[%s306 + $0x4c] sm:$0xf] %vm1772, %v1727
        %1793 = vst.msk [vmem:[%s306 + $0x50] sm:$0xf] %vm1772, %v1728
        %1794 = vst.msk [vmem:[%s306 + $0x54] sm:$0xf] %vm1772, %v1729
        %1795 = vst.msk [vmem:[%s306 + $0x58] sm:$0xf] %vm1772, %v1730
        %1796 = vst.msk [vmem:[%s306 + $0x5c] sm:$0xf] %vm1772, %v1731
        %1797 = vst.msk [vmem:[%s306 + $0x60] sm:$0xf] %vm1772, %v1732
        %1798 = vst.msk [vmem:[%s306 + $0x64] sm:$0xf] %vm1772, %v1733
        %1799 = vst.msk [vmem:[%s306 + $0x68] sm:$0xf] %vm1772, %v1734
        %1800 = vst.msk [vmem:[%s306 + $0x6c] sm:$0xf] %vm1772, %v1735
        %1801 = vst.msk [vmem:[%s306 + $0x70] sm:$0xf] %vm1772, %v1736
        %1802 = vst.msk [vmem:[%s306 + $0x74] sm:$0xf] %vm1772, %v1737
        %1803 = vst.msk [vmem:[%s306 + $0x78] sm:$0xf] %vm1772, %v1738
        %1804 = vst.msk [vmem:[%s306 + $0x7c] sm:$0xf] %vm1772, %v1739
        %1805 = vst.msk [vmem:[%s306 + $0x80] sm:$0xf] %vm1772, %v1740
        %1806 = vst.msk [vmem:[%s306 + $0x84] sm:$0xf] %vm1772, %v1741
        %1807 = vst.msk [vmem:[%s306 + $0x88] sm:$0xf] %vm1772, %v1742
        %1808 = vst.msk [vmem:[%s306 + $0x8c] sm:$0xf] %vm1772, %v1743
        %1809 = vst.msk [vmem:[%s306 + $0x90] sm:$0xf] %vm1772, %v1744
        %1810 = vst.msk [vmem:[%s306 + $0x94] sm:$0xf] %vm1772, %v1745
        %1811 = vst.msk [vmem:[%s306 + $0x98] sm:$0xf] %vm1772, %v1746
        %1812 = vst.msk [vmem:[%s306 + $0x9c] sm:$0xf] %vm1772, %v1747
        %1813 = vst.msk [vmem:[%s306 + $0xa0] sm:$0xf] %vm1772, %v1748
        %1814 = vst.msk [vmem:[%s306 + $0xa4] sm:$0xf] %vm1772, %v1749
        %1815 = vst.msk [vmem:[%s306 + $0xa8] sm:$0xf] %vm1772, %v1750
        %1816 = vst.msk [vmem:[%s306 + $0xac] sm:$0xf] %vm1772, %v1751
        %1817 = vst.msk [vmem:[%s306 + $0xb0] sm:$0xf] %vm1772, %v1752
        %1818 = vst.msk [vmem:[%s306 + $0xb4] sm:$0xf] %vm1772, %v1753
        %1819 = vst.msk [vmem:[%s306 + $0xb8] sm:$0xf] %vm1772, %v1754
        %1820 = vst.msk [vmem:[%s306 + $0xbc] sm:$0xf] %vm1772, %v1755
        %1821 = vst.msk [vmem:[%s306 + $0xc0] sm:$0xf] %vm1772, %v1756
        %1822 = vst.msk [vmem:[%s306 + $0xc4] sm:$0xf] %vm1772, %v1757
        %1823 = vst.msk [vmem:[%s306 + $0xc8] sm:$0xf] %vm1772, %v1758
        %1824 = vst.msk [vmem:[%s306 + $0xcc] sm:$0xf] %vm1772, %v1759
        %1825 = vst.msk [vmem:[%s306 + $0xd0] sm:$0xf] %vm1772, %v1760
        %1826 = vst.msk [vmem:[%s306 + $0xd4] sm:$0xf] %vm1772, %v1761
        %1827 = vst.msk [vmem:[%s306 + $0xd8] sm:$0xf] %vm1772, %v1762
        %1828 = vst.msk [vmem:[%s306 + $0xdc] sm:$0xf] %vm1772, %v1763
        %1829 = vst.msk [vmem:[%s306 + $0xe0] sm:$0xf] %vm1772, %v1764
        %1830 = vst.msk [vmem:[%s306 + $0xe4] sm:$0xf] %vm1772, %v1765
        %1831 = vst.msk [vmem:[%s306 + $0xe8] sm:$0xf] %vm1772, %v1766
        %1832 = vst.msk [vmem:[%s306 + $0xec] sm:$0xf] %vm1772, %v1767
        %1833 = vst.msk [vmem:[%s306 + $0xf0] sm:$0xf] %vm1772, %v1768
        %1834 = vst.msk [vmem:[%s306 + $0xf4] sm:$0xf] %vm1772, %v1769
        %1835 = vst.msk [vmem:[%s306 + $0xf8] sm:$0xf] %vm1772, %v1770
        %1836 = vst.msk [vmem:[%s306 + $0xfc] sm:$0xf] %vm1772, %v1771
      $region44: #{matmul_affine.1} parent=35 // pred_fallthru
        _
      %s1837 = smul.u32 64, %s20
      %p1838 = scmp.lt.s32.totalorder %s1837, 255
      %s1839 = scalar_select %p1838, %s1837, 255
      %p1840 = scmp.lt.s32.totalorder %s21, 0
      %s1841 = scalar_select %p1840, %s21, 0
      %s1842 = sadd.s32 %s1841, %s1839
      %s1843 = smul.addr %s1842, 4
      %s1844 = scalar_lea.vmem %s4, %s1843
      // Predicated region
      $region45: #{matmul_affine.1} parent=35 // pred_check
        %p1845 = pneg %p162
      $region46: #{matmul_affine.1} parent=35 // pred_check_branch
        %1847 = sbr.rel (%p1845) target = $region48
      $region47: #{matmul_affine.1} parent=35 // pred_region
        %s1848 = smul.u32 64, %s20
      $region48: #{matmul_affine.1} parent=35 // pred_fallthru
        _
    $region36: #{matmul_affine.1} parent=5 // pred_fallthru
      _
    %p1849 = scmp.le.s32.totalorder 2, %s10
    // Predicated region
    $region49: #{matmul_affine.1} parent=5 // pred_check
      %p1850 = pneg %p1849
    $region50: #{matmul_affine.1} parent=5 // pred_check_branch
      %1852 = sbr.rel (%p1850) target = $region52
    $region51: #{matmul_affine.1} parent=5 // pred_region
      %s1853 = ssub.s32 %s10, 2
      // Predicated region
      $region53: #{matmul_affine.1} parent=51 // pred_check
        %p1854 = pneg %p168
      $region54: #{matmul_affine.1} parent=51 // pred_check_branch
        %1856 = sbr.rel (%p1854) target = $region56
      $region55: #{matmul_affine.1} parent=51 // pred_region
        %s1857 = smul.u32 64, %s23
        %p1858 = scmp.lt.s32.totalorder %s1857, 255
        %s1859 = scalar_select %p1858, %s1857, 255
        %p1860 = scmp.lt.s32.totalorder %s24, 0
        %s1861 = scalar_select %p1860, %s24, 0
        %s1862 = sadd.s32 %s1861, %s1859
        %s1863 = smul.addr %s1862, 4
        %s1864 = scalar_lea.vmem %s4, %s1863
      $region56: #{matmul_affine.1} parent=51 // pred_fallthru
        _
    $region52: #{matmul_affine.1} parent=5 // pred_fallthru
      _
  $region6: #{matmul_affine.1} parent=0 // loop_footer
    %s14 = sadd.s32 1, %s10
  $region7: #{matmul_affine.1} parent=0 // loop_footer_branch
    %9 = sbr.rel target = $region3
  $region8: #{matmul_affine.1} parent=0 // loop_exit
    _

</llo_original>
